<compile_context>
chip_gen: v5e
topology: v5e:2x2
jax: 0.10.0
libtpu: 0.0.40
codegen_flags: <defaults>
</compile_context>

<pallas_src>
import functools
import math

import jax
import jax.numpy as jnp
import numpy as np
from jax import lax
from jax.experimental import pallas as pl
from jax.experimental.pallas import tpu as pltpu

# ---- config -------------------------------------------------------------------
B = 2             # batch size
MAX_NODES = 4     # nodes per batch element
N = B * MAX_NODES # 8 "big batch" nodes
T = 8             # timesteps
IN_DIM = 4        # input_dim
HID = 32          # hidden_dim
NUM_HEADS = 2
HEAD_DIM = HID // NUM_HEADS
NT = N * T        # 64 node-major rows: row = n*T + t
HID3 = 3 * HID    # fused q|k|v width per node


# ---- fused kernel: GCN (2 layers) + per-node MultiheadAttention ----------------
def _fused_kernel(x_ref, p_ref, m_ref, w1_ref, b1_ref, w2_ref, b2_ref,
                  wqkv_ref, bqkv_ref, wo_ref, bo_ref,
                  out_ref, gcn_sc, *, nodes_per_block):
    f32 = jnp.float32
    m = m_ref[...]                                      # (NT, 1) ego mask
    pmat = p_ref[...]                                   # (NT, NT) block propagation

    # ---- stage 1: both GCN layers for every (node, timestep) row: 4 matmuls ----
    h1 = jnp.dot(x_ref[...], w1_ref[...], preferred_element_type=f32)
    g1 = m * jnp.maximum(jnp.dot(pmat, h1, preferred_element_type=f32)
                         + b1_ref[...], 0.0)
    g2 = m * (jnp.dot(pmat, jnp.dot(g1, w2_ref[...], preferred_element_type=f32),
                      preferred_element_type=f32) + b2_ref[...])        # (NT, HID)

    # node-major -> per-node (T, HID) views packed along lanes (no strided gather).
    if nodes_per_block == N:          # single program: static whole-vreg slices
        e_pieces = [g2[n * T:(n + 1) * T, :] for n in range(N)]
    else:                             # node-split grid (v7x): scratch + dynamic ds
        gcn_sc[...] = g2
        base = pl.program_id(0) * (nodes_per_block * T)
        e_pieces = [gcn_sc[pl.ds(pl.multiple_of(base + n * T, T), T), :]
                    for n in range(nodes_per_block)]
    e_packed = jnp.concatenate(e_pieces, axis=-1)       # (T, npb*HID), lane-dense

    # ---- stage 2a: q/k/v for all nodes in ONE block-diagonal matmul ------------
    # (external q/k/v linears, in_proj and positional encoding folded host-side)
    qkv = jnp.dot(e_packed, wqkv_ref[...], preferred_element_type=f32) + bqkv_ref[...]

    # ---- stage 2b: per-(node, head) scaled-dot-product attention ---------------
    scale = 1.0 / math.sqrt(HEAD_DIM)
    dn = (((1,), (1,)), ((), ()))                       # contract last dims: q @ k^T
    ctx = []
    for n in range(nodes_per_block):
        o = n * HID3
        for h in range(NUM_HEADS):
            q_h = qkv[:, o + h * HEAD_DIM:o + (h + 1) * HEAD_DIM]
            k_h = qkv[:, o + HID + h * HEAD_DIM:o + HID + (h + 1) * HEAD_DIM]
            v_h = qkv[:, o + 2 * HID + h * HEAD_DIM:o + 2 * HID + (h + 1) * HEAD_DIM]
            logits = lax.dot_general(q_h, k_h, dn, preferred_element_type=f32) * scale
            logits = logits - jnp.max(logits, axis=-1, keepdims=True)
            pr = jnp.exp(logits)
            pr = pr * pl.reciprocal(jnp.sum(pr, axis=-1, keepdims=True), approx=True)
            ctx.append(jnp.dot(pr, v_h, preferred_element_type=f32))    # (T, HEAD_DIM)
    ctx_packed = jnp.concatenate(ctx, axis=-1)          # (T, npb*HID) == head concat

    # ---- stage 2c: out-projection for all nodes in ONE matmul, single dense store
    out_ref[...] = (jnp.dot(ctx_packed, wo_ref[...], preferred_element_type=f32)
                    + bo_ref[...])


# ---- full forward (single pallas_call) ------------------------------------------
@functools.partial(jax.jit, static_argnames=("node_grid",))
def attention_gcn_forward(x, adj, ego_mask, params, node_grid=1):
    f32 = jnp.float32
    # (B, T, MAX_NODES) -> (T, N), matches torch permute(1,0,2).reshape
    mask_tn = jnp.transpose(ego_mask, (1, 0, 2)).reshape(T, N)
    mc = mask_tn[:, :, None]
    mr = mask_tn[:, None, :]

    # Host precompute of the normalized, masked propagation matrices
    # P_t = D^-1/2 (A_hat_t)^T D^-1/2 (self loops only on selected nodes),
    # assembled into one node-major block matrix P[(n,t),(m,s)] = P_t[n,m]*delta(t,s).
    a_hat = adj * mc * mr + jnp.eye(N, dtype=f32)[None] * mc              # (T, N, N)
    at = jnp.transpose(a_hat, (0, 2, 1))
    deg = jnp.sum(at, axis=2, keepdims=True)
    dinv = jnp.where(deg > 0.0, lax.rsqrt(jnp.where(deg > 0.0, deg, 1.0)), 0.0)
    p_t = dinv * at * jnp.transpose(dinv, (0, 2, 1))                      # (T, N, N)
    p_nm = jnp.einsum("tnm,ts->ntms", p_t, jnp.eye(T, dtype=f32)).reshape(NT, NT)

    x_nm = jnp.transpose(x, (1, 0, 2)).reshape(NT, IN_DIM)                # node-major
    mask_nm = jnp.transpose(mask_tn).reshape(NT, 1)

    npb = N // node_grid
    full2 = lambda i: (0, 0)
    in_specs = [
        pl.BlockSpec((NT, IN_DIM), full2),                      # x (node-major)
        pl.BlockSpec((NT, NT), full2),                          # P (block propagation)
        pl.BlockSpec((NT, 1), full2),                           # ego mask
        pl.BlockSpec((IN_DIM, HID), full2),                     # gcn1 weight
        pl.BlockSpec((1, HID), full2),                          # gcn1 bias
        pl.BlockSpec((HID, HID), full2),                        # gcn2 weight
        pl.BlockSpec((1, HID), full2),                          # gcn2 bias
        pl.BlockSpec((npb * HID, npb * HID3), lambda i: (i, i)),  # block-diag q/k/v
        pl.BlockSpec((T, npb * HID3), lambda i: (0, i)),          # q/k/v bias (+pos)
        pl.BlockSpec((npb * HID, npb * HID), lambda i: (i, i)),   # block-diag out-proj
        pl.BlockSpec((1, npb * HID), lambda i: (0, i)),           # out-proj bias
    ]
    out = pl.pallas_call(
        functools.partial(_fused_kernel, nodes_per_block=npb),
        out_shape=jax.ShapeDtypeStruct((T, N * HID), f32),
        grid=(node_grid,),
        in_specs=in_specs,
        out_specs=pl.BlockSpec((T, npb * HID), lambda i: (0, i)),
        scratch_shapes=[pltpu.VMEM((NT, HID), f32)],
        compiler_params=pltpu.CompilerParams(
            dimension_semantics=(("parallel",) if node_grid > 1 else ("arbitrary",))),
    )(x_nm, p_nm, mask_nm,
      params["w1"], params["b1"], params["w2"], params["b2"],
      params["wqkv"], params["bqkv"], params["wo"], params["bo"])

    # lane-dense (T, N*HID) -> (B, MAX_NODES, T, HID); cheap XLA plumbing.
    out = jnp.transpose(out.reshape(T, N, HID), (1, 0, 2))
    return out.reshape(B, MAX_NODES, T, HID)


# ---- deterministic parameter init (raw, PyTorch-layout) --------------------------
def sinusoidal_encoding(timesteps, dim):
    pos = np.arange(timesteps, dtype=np.float32)[:, None]
    div = np.exp(np.arange(0, dim, 2, dtype=np.float32) * (-math.log(10000.0) / dim))
    enc = np.zeros((timesteps, dim), np.float32)
    enc[:, 0::2] = np.sin(pos * div)
    enc[:, 1::2] = np.cos(pos * div)
    return enc


def init_params(key):
    keys = jax.random.split(key, 32)
    ki = iter(keys)

    def lin(fan_in, fan_out):
        w = jax.random.normal(next(ki), (fan_in, fan_out), jnp.float32) / math.sqrt(fan_in)
        b = jax.random.normal(next(ki), (1, fan_out), jnp.float32) * 0.01
        return w, b

    def per_node():
        w = jax.random.normal(next(ki), (N, HID, HID), jnp.float32) / math.sqrt(HID)
        b = jax.random.normal(next(ki), (N, 1, HID), jnp.float32) * 0.01
        return w, b

    w1, b1 = lin(IN_DIM, HID)
    w2, b2 = lin(HID, HID)
    attn = []
    for _ in range(7):  # ext q/k/v, in_proj q/k/v, out_proj
        w, b = per_node()
        attn.extend([w, b])
    return {"w1": w1, "b1": b1, "w2": w2, "b2": b2,
            "attn": tuple(attn), "pos": jnp.asarray(sinusoidal_encoding(T, HID))}


def prepare_params(raw):
    """One-time host-side folding/packing of the per-node attention params:
    external q/k/v folded into in_proj (exact), positional encoding folded into
    the q/k/v biases, per-node weights packed block-diagonally for the batched
    (all-nodes-at-once) kernel projections."""
    (wq, bq, wk, bk, wv, bv,
     wiq, biq, wik, bik, wiv, biv, wo, bo) = raw["attn"]
    pos = raw["pos"]
    hi = jax.lax.Precision.HIGHEST
    eye_n = jnp.eye(N, dtype=jnp.float32)

    def fold(w_ext, b_ext, w_in, b_in):
        w_c = jnp.einsum("nij,njk->nik", w_ext, w_in, precision=hi)           # (N,H,H)
        b_c = jnp.einsum("noj,njk->nok", b_ext, w_in, precision=hi) + b_in    # (N,1,H)
        b_pos = jnp.einsum("td,ndk->ntk", pos, w_c, precision=hi) + b_c       # (N,T,H)
        return w_c, b_pos

    wq_c, bq_p = fold(wq, bq, wiq, biq)
    wk_c, bk_p = fold(wk, bk, wik, bik)
    wv_c, bv_p = fold(wv, bv, wiv, biv)

    wqkv_stack = jnp.concatenate([wq_c, wk_c, wv_c], axis=-1)                 # (N,H,3H)
    bqkv_stack = jnp.concatenate([bq_p, bk_p, bv_p], axis=-1)                 # (N,T,3H)

    def block_diag(w):  # (N, a, b) -> (N*a, N*b), node n on the diagonal
        n, a, b = w.shape
        return jnp.einsum("npq,nm->npmq", w, eye_n).reshape(n * a, n * b)

    return {
        "w1": raw["w1"], "b1": raw["b1"], "w2": raw["w2"], "b2": raw["b2"],
        "wqkv": block_diag(wqkv_stack),                                       # (N*H, N*3H)
        "bqkv": jnp.transpose(bqkv_stack, (1, 0, 2)).reshape(T, N * HID3),    # (T, N*3H)
        "wo": block_diag(wo),                                                 # (N*H, N*H)
        "bo": jnp.transpose(bo, (1, 0, 2)).reshape(1, N * HID),               # (1, N*H)
    }


# ---- pure-numpy reference (exact PyTorch-style masked sub-graph semantics) -------
def reference_forward(x, adj, ego_mask, params):
    x = np.asarray(x); adj = np.asarray(adj); ego_mask = np.asarray(ego_mask)
    w1 = np.asarray(params["w1"]); b1 = np.asarray(params["b1"])[0]
    w2 = np.asarray(params["w2"]); b2 = np.asarray(params["b2"])[0]
    (wq, bq, wk, bk, wv, bv, wiq, biq, wik, bik, wiv, biv, wo, bo) = \
        [np.asarray(a) for a in params["attn"]]
    pos = np.asarray(params["pos"])

    mask_tn = ego_mask.transpose(1, 0, 2).reshape(T, N).astype(bool)
    ph = np.zeros((T, N, HID), np.float32)
    for t in range(T):
        idx = np.nonzero(mask_tn[t])[0]
        if idx.size == 0:
            continue
        xs = x[t][idx]
        As = adj[t][np.ix_(idx, idx)]
        Ah = As + np.eye(idx.size, dtype=np.float32)
        At = Ah.T
        deg = At.sum(axis=1)
        dinv = 1.0 / np.sqrt(deg)
        P = dinv[:, None] * At * dinv[None, :]
        h1 = np.maximum(P @ (xs @ w1) + b1, 0.0)
        ph[t, idx] = P @ (h1 @ w2) + b2

    emb = ph.transpose(1, 0, 2) + pos[None]
    outs = []
    for nidx in range(N):
        e = emb[nidx]
        q = e @ wq[nidx] + bq[nidx][0]
        k_ = e @ wk[nidx] + bk[nidx][0]
        v = e @ wv[nidx] + bv[nidx][0]
        qp = q @ wiq[nidx] + biq[nidx][0]
        kp = k_ @ wik[nidx] + bik[nidx][0]
        vp = v @ wiv[nidx] + biv[nidx][0]
        heads = []
        for h in range(NUM_HEADS):
            sl = slice(h * HEAD_DIM, (h + 1) * HEAD_DIM)
            s = (qp[:, sl] @ kp[:, sl].T) / math.sqrt(HEAD_DIM)
            s = s - s.max(axis=-1, keepdims=True)
            p = np.exp(s); p = p / p.sum(axis=-1, keepdims=True)
            heads.append(p @ vp[:, sl])
        outs.append(np.concatenate(heads, axis=-1) @ wo[nidx] + bo[nidx][0])
    return np.stack(outs, axis=0).reshape(B, MAX_NODES, T, HID)


def _pick_node_grid():
    """Use both TensorCores on v7x (2 TC/chip); single program elsewhere."""
    try:
        kind = jax.devices()[0].device_kind.lower()
    except Exception:
        return 1
    return 2 if "v7" in kind else 1


# ---- main -------------------------------------------------------------------------
if __name__ == "__main__":
    key = jax.random.PRNGKey(0)
    k_x, k_a, k_m, k_p = jax.random.split(key, 4)

    x = jax.random.normal(k_x, (T, N, IN_DIM), jnp.float32)

    rnd = jax.random.uniform(k_a, (T, N, N)) < 0.4
    adj = jnp.logical_or(rnd, jnp.transpose(rnd, (0, 2, 1)))
    adj = jnp.logical_and(adj, ~jnp.eye(N, dtype=bool)[None]).astype(jnp.float32)

    ego_mask = (jax.random.uniform(k_m, (B, T, MAX_NODES)) < 0.75).astype(jnp.float32)

    raw_params = init_params(k_p)
    params = prepare_params(raw_params)   # one-time host-side fold + block-diag pack

    node_grid = _pick_node_grid()
    out = attention_gcn_forward(x, adj, ego_mask, params, node_grid=node_grid)
    out = jax.block_until_ready(out)

    ref = reference_forward(x, adj, ego_mask, raw_params)
    assert out.shape == (B, MAX_NODES, T, HID)
    err = float(np.max(np.abs(np.asarray(out) - ref)))
    # All-f32 path is ~1e-4 off; 1e-2 leaves headroom for the approx-reciprocal softmax.
    assert err < 1e-2, f"max abs error {err}"

    print("KERNEL_OK")
</pallas_src>

<mosaic_0001>
module attributes {stable_mosaic.version = 11 : i64} {
  func.func @_fused_kernel(%arg0: i32, %arg1: memref<64x4xf32, #tpu.memory_space<vmem>>, %arg2: memref<64x64xf32, #tpu.memory_space<vmem>>, %arg3: memref<64x1xf32, #tpu.memory_space<vmem>>, %arg4: memref<4x32xf32, #tpu.memory_space<vmem>>, %arg5: memref<1x32xf32, #tpu.memory_space<vmem>>, %arg6: memref<32x32xf32, #tpu.memory_space<vmem>>, %arg7: memref<1x32xf32, #tpu.memory_space<vmem>>, %arg8: memref<256x768xf32, #tpu.memory_space<vmem>>, %arg9: memref<8x768xf32, #tpu.memory_space<vmem>>, %arg10: memref<256x256xf32, #tpu.memory_space<vmem>>, %arg11: memref<1x256xf32, #tpu.memory_space<vmem>>, %arg12: memref<8x256xf32, #tpu.memory_space<vmem>>, %arg13: memref<64x32xf32, #tpu.memory_space<vmem>>) attributes {dimension_semantics = [#tpu.dimension_semantics<arbitrary>], iteration_bounds = array<i64: 1>, scalar_prefetch = 0 : i64, scratch_operands = 1 : i64, tpu.core_type = #tpu.core_type<tc>, window_params = [{pipeline_mode = #tpu.pipeline_mode<synchronous>, transform_indices = @transform_0, window_bounds = array<i64: 64, 4>}, {pipeline_mode = #tpu.pipeline_mode<synchronous>, transform_indices = @transform_1, window_bounds = array<i64: 64, 64>}, {pipeline_mode = #tpu.pipeline_mode<synchronous>, transform_indices = @transform_2, window_bounds = array<i64: 64, 1>}, {pipeline_mode = #tpu.pipeline_mode<synchronous>, transform_indices = @transform_3, window_bounds = array<i64: 4, 32>}, {pipeline_mode = #tpu.pipeline_mode<synchronous>, transform_indices = @transform_4, window_bounds = array<i64: 1, 32>}, {pipeline_mode = #tpu.pipeline_mode<synchronous>, transform_indices = @transform_5, window_bounds = array<i64: 32, 32>}, {pipeline_mode = #tpu.pipeline_mode<synchronous>, transform_indices = @transform_6, window_bounds = array<i64: 1, 32>}, {transform_indices = @transform_7, window_bounds = array<i64: 256, 768>}, {transform_indices = @transform_8, window_bounds = array<i64: 8, 768>}, {transform_indices = @transform_9, window_bounds = array<i64: 256, 256>}, {transform_indices = @transform_10, window_bounds = array<i64: 1, 256>}, {transform_indices = @transform_11, window_bounds = array<i64: 8, 256>}]} {
    %c0 = arith.constant 0 : index
    %c0_0 = arith.constant 0 : index
    %0 = vector.load %arg3[%c0, %c0_0] : memref<64x1xf32, #tpu.memory_space<vmem>>, vector<64x1xf32>
    %c0_1 = arith.constant 0 : index
    %c0_2 = arith.constant 0 : index
    %1 = vector.load %arg2[%c0_1, %c0_2] : memref<64x64xf32, #tpu.memory_space<vmem>>, vector<64x64xf32>
    %c0_3 = arith.constant 0 : index
    %c0_4 = arith.constant 0 : index
    %2 = vector.load %arg1[%c0_3, %c0_4] : memref<64x4xf32, #tpu.memory_space<vmem>>, vector<64x4xf32>
    %c0_5 = arith.constant 0 : index
    %c0_6 = arith.constant 0 : index
    %3 = vector.load %arg4[%c0_5, %c0_6] : memref<4x32xf32, #tpu.memory_space<vmem>>, vector<4x32xf32>
    %cst = arith.constant dense<0.000000e+00> : vector<64x32xf32>
    %4 = tpu.matmul %2, %3, %cst {dimension_numbers = #tpu.dot_dimension_numbers<[1], [0], [0], [1], [0, 0, 1, 1], [], []>} : vector<64x4xf32>, vector<4x32xf32>, vector<64x32xf32> -> vector<64x32xf32>
    %cst_7 = arith.constant dense<0.000000e+00> : vector<64x32xf32>
    %5 = tpu.matmul %1, %4, %cst_7 {dimension_numbers = #tpu.dot_dimension_numbers<[1], [0], [0], [1], [0, 0, 1, 1], [], []>} : vector<64x64xf32>, vector<64x32xf32>, vector<64x32xf32> -> vector<64x32xf32>
    %c0_8 = arith.constant 0 : index
    %c0_9 = arith.constant 0 : index
    %6 = vector.load %arg5[%c0_8, %c0_9] : memref<1x32xf32, #tpu.memory_space<vmem>>, vector<1x32xf32>
    %7 = vector.broadcast %6 : vector<1x32xf32> to vector<64x32xf32>
    %8 = arith.addf %5, %7 : vector<64x32xf32>
    %cst_10 = arith.constant 0.000000e+00 : f32
    %9 = vector.broadcast %cst_10 : f32 to vector<64x32xf32>
    %10 = arith.maximumf %8, %9 : vector<64x32xf32>
    %11 = vector.broadcast %0 : vector<64x1xf32> to vector<64x32xf32>
    %12 = arith.mulf %11, %10 : vector<64x32xf32>
    %c0_11 = arith.constant 0 : index
    %c0_12 = arith.constant 0 : index
    %13 = vector.load %arg6[%c0_11, %c0_12] : memref<32x32xf32, #tpu.memory_space<vmem>>, vector<32x32xf32>
    %cst_13 = arith.constant dense<0.000000e+00> : vector<64x32xf32>
    %14 = tpu.matmul %12, %13, %cst_13 {dimension_numbers = #tpu.dot_dimension_numbers<[1], [0], [0], [1], [0, 0, 1, 1], [], []>} : vector<64x32xf32>, vector<32x32xf32>, vector<64x32xf32> -> vector<64x32xf32>
    %cst_14 = arith.constant dense<0.000000e+00> : vector<64x32xf32>
    %15 = tpu.matmul %1, %14, %cst_14 {dimension_numbers = #tpu.dot_dimension_numbers<[1], [0], [0], [1], [0, 0, 1, 1], [], []>} : vector<64x64xf32>, vector<64x32xf32>, vector<64x32xf32> -> vector<64x32xf32>
    %c0_15 = arith.constant 0 : index
    %c0_16 = arith.constant 0 : index
    %16 = vector.load %arg7[%c0_15, %c0_16] : memref<1x32xf32, #tpu.memory_space<vmem>>, vector<1x32xf32>
    %17 = vector.broadcast %16 : vector<1x32xf32> to vector<64x32xf32>
    %18 = arith.addf %15, %17 : vector<64x32xf32>
    %19 = vector.broadcast %0 : vector<64x1xf32> to vector<64x32xf32>
    %20 = arith.mulf %19, %18 : vector<64x32xf32>
    %21 = vector.extract_strided_slice %20 {offsets = [0, 0], sizes = [8, 32], strides = [1, 1]} : vector<64x32xf32> to vector<8x32xf32>
    %22 = vector.extract_strided_slice %20 {offsets = [8, 0], sizes = [8, 32], strides = [1, 1]} : vector<64x32xf32> to vector<8x32xf32>
    %23 = vector.extract_strided_slice %20 {offsets = [16, 0], sizes = [8, 32], strides = [1, 1]} : vector<64x32xf32> to vector<8x32xf32>
    %24 = vector.extract_strided_slice %20 {offsets = [24, 0], sizes = [8, 32], strides = [1, 1]} : vector<64x32xf32> to vector<8x32xf32>
    %25 = vector.extract_strided_slice %20 {offsets = [32, 0], sizes = [8, 32], strides = [1, 1]} : vector<64x32xf32> to vector<8x32xf32>
    %26 = vector.extract_strided_slice %20 {offsets = [40, 0], sizes = [8, 32], strides = [1, 1]} : vector<64x32xf32> to vector<8x32xf32>
    %27 = vector.extract_strided_slice %20 {offsets = [48, 0], sizes = [8, 32], strides = [1, 1]} : vector<64x32xf32> to vector<8x32xf32>
    %28 = vector.extract_strided_slice %20 {offsets = [56, 0], sizes = [8, 32], strides = [1, 1]} : vector<64x32xf32> to vector<8x32xf32>
    %29 = tpu.concatenate %21, %22, %23, %24, %25, %26, %27, %28 in 1 : vector<8x32xf32>, vector<8x32xf32>, vector<8x32xf32>, vector<8x32xf32>, vector<8x32xf32>, vector<8x32xf32>, vector<8x32xf32>, vector<8x32xf32> -> vector<8x256xf32>
    %c0_17 = arith.constant 0 : index
    %c0_18 = arith.constant 0 : index
    %30 = vector.load %arg8[%c0_17, %c0_18] : memref<256x768xf32, #tpu.memory_space<vmem>>, vector<256x768xf32>
    %cst_19 = arith.constant dense<0.000000e+00> : vector<8x768xf32>
    %31 = tpu.matmul %29, %30, %cst_19 {dimension_numbers = #tpu.dot_dimension_numbers<[1], [0], [0], [1], [0, 0, 1, 1], [], []>} : vector<8x256xf32>, vector<256x768xf32>, vector<8x768xf32> -> vector<8x768xf32>
    %c0_20 = arith.constant 0 : index
    %c0_21 = arith.constant 0 : index
    %32 = vector.load %arg9[%c0_20, %c0_21] : memref<8x768xf32, #tpu.memory_space<vmem>>, vector<8x768xf32>
    %33 = arith.addf %31, %32 : vector<8x768xf32>
    %34 = vector.extract_strided_slice %33 {offsets = [0, 0], sizes = [8, 16], strides = [1, 1]} : vector<8x768xf32> to vector<8x16xf32>
    %35 = vector.extract_strided_slice %33 {offsets = [0, 32], sizes = [8, 16], strides = [1, 1]} : vector<8x768xf32> to vector<8x16xf32>
    %36 = vector.extract_strided_slice %33 {offsets = [0, 64], sizes = [8, 16], strides = [1, 1]} : vector<8x768xf32> to vector<8x16xf32>
    %cst_22 = arith.constant dense<0.000000e+00> : vector<8x8xf32>
    %37 = tpu.matmul %34, %35, %cst_22 {dimension_numbers = #tpu.dot_dimension_numbers<[1], [1], [0], [0], [0, 0, 1, 0], [], []>} : vector<8x16xf32>, vector<8x16xf32>, vector<8x8xf32> -> vector<8x8xf32>
    %cst_23 = arith.constant 2.500000e-01 : f32
    %38 = vector.broadcast %cst_23 : f32 to vector<8x8xf32>
    %39 = arith.mulf %37, %38 : vector<8x8xf32>
    %cst_24 = arith.constant dense<0xFF800000> : vector<8xf32>
    %40 = vector.multi_reduction <maximumf>, %39, %cst_24 [1] : vector<8x8xf32> to vector<8xf32>
    %41 = vector.shape_cast %40 : vector<8xf32> to vector<8x1xf32>
    %42 = vector.broadcast %41 : vector<8x1xf32> to vector<8x8xf32>
    %43 = arith.subf %39, %42 : vector<8x8xf32>
    %44 = math.exp %43 : vector<8x8xf32>
    %cst_25 = arith.constant dense<0.000000e+00> : vector<8xf32>
    %45 = vector.multi_reduction <add>, %44, %cst_25 [1] : vector<8x8xf32> to vector<8xf32>
    %46 = vector.shape_cast %45 : vector<8xf32> to vector<8x1xf32>
    %47 = tpu.reciprocal %46 {approx = true} : vector<8x1xf32> -> vector<8x1xf32>
    %48 = vector.broadcast %47 : vector<8x1xf32> to vector<8x8xf32>
    %49 = arith.mulf %44, %48 : vector<8x8xf32>
    %cst_26 = arith.constant dense<0.000000e+00> : vector<8x16xf32>
    %50 = tpu.matmul %49, %36, %cst_26 {dimension_numbers = #tpu.dot_dimension_numbers<[1], [0], [0], [1], [0, 0, 1, 1], [], []>} : vector<8x8xf32>, vector<8x16xf32>, vector<8x16xf32> -> vector<8x16xf32>
    %51 = vector.extract_strided_slice %33 {offsets = [0, 16], sizes = [8, 16], strides = [1, 1]} : vector<8x768xf32> to vector<8x16xf32>
    %52 = vector.extract_strided_slice %33 {offsets = [0, 48], sizes = [8, 16], strides = [1, 1]} : vector<8x768xf32> to vector<8x16xf32>
    %53 = vector.extract_strided_slice %33 {offsets = [0, 80], sizes = [8, 16], strides = [1, 1]} : vector<8x768xf32> to vector<8x16xf32>
    %cst_27 = arith.constant dense<0.000000e+00> : vector<8x8xf32>
    %54 = tpu.matmul %51, %52, %cst_27 {dimension_numbers = #tpu.dot_dimension_numbers<[1], [1], [0], [0], [0, 0, 1, 0], [], []>} : vector<8x16xf32>, vector<8x16xf32>, vector<8x8xf32> -> vector<8x8xf32>
    %cst_28 = arith.constant 2.500000e-01 : f32
    %55 = vector.broadcast %cst_28 : f32 to vector<8x8xf32>
    %56 = arith.mulf %54, %55 : vector<8x8xf32>
    %cst_29 = arith.constant dense<0xFF800000> : vector<8xf32>
    %57 = vector.multi_reduction <maximumf>, %56, %cst_29 [1] : vector<8x8xf32> to vector<8xf32>
    %58 = vector.shape_cast %57 : vector<8xf32> to vector<8x1xf32>
    %59 = vector.broadcast %58 : vector<8x1xf32> to vector<8x8xf32>
    %60 = arith.subf %56, %59 : vector<8x8xf32>
    %61 = math.exp %60 : vector<8x8xf32>
    %cst_30 = arith.constant dense<0.000000e+00> : vector<8xf32>
    %62 = vector.multi_reduction <add>, %61, %cst_30 [1] : vector<8x8xf32> to vector<8xf32>
    %63 = vector.shape_cast %62 : vector<8xf32> to vector<8x1xf32>
    %64 = tpu.reciprocal %63 {approx = true} : vector<8x1xf32> -> vector<8x1xf32>
    %65 = vector.broadcast %64 : vector<8x1xf32> to vector<8x8xf32>
    %66 = arith.mulf %61, %65 : vector<8x8xf32>
    %cst_31 = arith.constant dense<0.000000e+00> : vector<8x16xf32>
    %67 = tpu.matmul %66, %53, %cst_31 {dimension_numbers = #tpu.dot_dimension_numbers<[1], [0], [0], [1], [0, 0, 1, 1], [], []>} : vector<8x8xf32>, vector<8x16xf32>, vector<8x16xf32> -> vector<8x16xf32>
    %68 = vector.extract_strided_slice %33 {offsets = [0, 96], sizes = [8, 16], strides = [1, 1]} : vector<8x768xf32> to vector<8x16xf32>
    %69 = vector.extract_strided_slice %33 {offsets = [0, 128], sizes = [8, 16], strides = [1, 1]} : vector<8x768xf32> to vector<8x16xf32>
    %70 = vector.extract_strided_slice %33 {offsets = [0, 160], sizes = [8, 16], strides = [1, 1]} : vector<8x768xf32> to vector<8x16xf32>
    %cst_32 = arith.constant dense<0.000000e+00> : vector<8x8xf32>
    %71 = tpu.matmul %68, %69, %cst_32 {dimension_numbers = #tpu.dot_dimension_numbers<[1], [1], [0], [0], [0, 0, 1, 0], [], []>} : vector<8x16xf32>, vector<8x16xf32>, vector<8x8xf32> -> vector<8x8xf32>
    %cst_33 = arith.constant 2.500000e-01 : f32
    %72 = vector.broadcast %cst_33 : f32 to vector<8x8xf32>
    %73 = arith.mulf %71, %72 : vector<8x8xf32>
    %cst_34 = arith.constant dense<0xFF800000> : vector<8xf32>
    %74 = vector.multi_reduction <maximumf>, %73, %cst_34 [1] : vector<8x8xf32> to vector<8xf32>
    %75 = vector.shape_cast %74 : vector<8xf32> to vector<8x1xf32>
    %76 = vector.broadcast %75 : vector<8x1xf32> to vector<8x8xf32>
    %77 = arith.subf %73, %76 : vector<8x8xf32>
    %78 = math.exp %77 : vector<8x8xf32>
    %cst_35 = arith.constant dense<0.000000e+00> : vector<8xf32>
    %79 = vector.multi_reduction <add>, %78, %cst_35 [1] : vector<8x8xf32> to vector<8xf32>
    %80 = vector.shape_cast %79 : vector<8xf32> to vector<8x1xf32>
    %81 = tpu.reciprocal %80 {approx = true} : vector<8x1xf32> -> vector<8x1xf32>
    %82 = vector.broadcast %81 : vector<8x1xf32> to vector<8x8xf32>
    %83 = arith.mulf %78, %82 : vector<8x8xf32>
    %cst_36 = arith.constant dense<0.000000e+00> : vector<8x16xf32>
    %84 = tpu.matmul %83, %70, %cst_36 {dimension_numbers = #tpu.dot_dimension_numbers<[1], [0], [0], [1], [0, 0, 1, 1], [], []>} : vector<8x8xf32>, vector<8x16xf32>, vector<8x16xf32> -> vector<8x16xf32>
    %85 = vector.extract_strided_slice %33 {offsets = [0, 112], sizes = [8, 16], strides = [1, 1]} : vector<8x768xf32> to vector<8x16xf32>
    %86 = vector.extract_strided_slice %33 {offsets = [0, 144], sizes = [8, 16], strides = [1, 1]} : vector<8x768xf32> to vector<8x16xf32>
    %87 = vector.extract_strided_slice %33 {offsets = [0, 176], sizes = [8, 16], strides = [1, 1]} : vector<8x768xf32> to vector<8x16xf32>
    %cst_37 = arith.constant dense<0.000000e+00> : vector<8x8xf32>
    %88 = tpu.matmul %85, %86, %cst_37 {dimension_numbers = #tpu.dot_dimension_numbers<[1], [1], [0], [0], [0, 0, 1, 0], [], []>} : vector<8x16xf32>, vector<8x16xf32>, vector<8x8xf32> -> vector<8x8xf32>
    %cst_38 = arith.constant 2.500000e-01 : f32
    %89 = vector.broadcast %cst_38 : f32 to vector<8x8xf32>
    %90 = arith.mulf %88, %89 : vector<8x8xf32>
    %cst_39 = arith.constant dense<0xFF800000> : vector<8xf32>
    %91 = vector.multi_reduction <maximumf>, %90, %cst_39 [1] : vector<8x8xf32> to vector<8xf32>
    %92 = vector.shape_cast %91 : vector<8xf32> to vector<8x1xf32>
    %93 = vector.broadcast %92 : vector<8x1xf32> to vector<8x8xf32>
    %94 = arith.subf %90, %93 : vector<8x8xf32>
    %95 = math.exp %94 : vector<8x8xf32>
    %cst_40 = arith.constant dense<0.000000e+00> : vector<8xf32>
    %96 = vector.multi_reduction <add>, %95, %cst_40 [1] : vector<8x8xf32> to vector<8xf32>
    %97 = vector.shape_cast %96 : vector<8xf32> to vector<8x1xf32>
    %98 = tpu.reciprocal %97 {approx = true} : vector<8x1xf32> -> vector<8x1xf32>
    %99 = vector.broadcast %98 : vector<8x1xf32> to vector<8x8xf32>
    %100 = arith.mulf %95, %99 : vector<8x8xf32>
    %cst_41 = arith.constant dense<0.000000e+00> : vector<8x16xf32>
    %101 = tpu.matmul %100, %87, %cst_41 {dimension_numbers = #tpu.dot_dimension_numbers<[1], [0], [0], [1], [0, 0, 1, 1], [], []>} : vector<8x8xf32>, vector<8x16xf32>, vector<8x16xf32> -> vector<8x16xf32>
    %102 = vector.extract_strided_slice %33 {offsets = [0, 192], sizes = [8, 16], strides = [1, 1]} : vector<8x768xf32> to vector<8x16xf32>
    %103 = vector.extract_strided_slice %33 {offsets = [0, 224], sizes = [8, 16], strides = [1, 1]} : vector<8x768xf32> to vector<8x16xf32>
    %104 = vector.extract_strided_slice %33 {offsets = [0, 256], sizes = [8, 16], strides = [1, 1]} : vector<8x768xf32> to vector<8x16xf32>
    %cst_42 = arith.constant dense<0.000000e+00> : vector<8x8xf32>
    %105 = tpu.matmul %102, %103, %cst_42 {dimension_numbers = #tpu.dot_dimension_numbers<[1], [1], [0], [0], [0, 0, 1, 0], [], []>} : vector<8x16xf32>, vector<8x16xf32>, vector<8x8xf32> -> vector<8x8xf32>
    %cst_43 = arith.constant 2.500000e-01 : f32
    %106 = vector.broadcast %cst_43 : f32 to vector<8x8xf32>
    %107 = arith.mulf %105, %106 : vector<8x8xf32>
    %cst_44 = arith.constant dense<0xFF800000> : vector<8xf32>
    %108 = vector.multi_reduction <maximumf>, %107, %cst_44 [1] : vector<8x8xf32> to vector<8xf32>
    %109 = vector.shape_cast %108 : vector<8xf32> to vector<8x1xf32>
    %110 = vector.broadcast %109 : vector<8x1xf32> to vector<8x8xf32>
    %111 = arith.subf %107, %110 : vector<8x8xf32>
    %112 = math.exp %111 : vector<8x8xf32>
    %cst_45 = arith.constant dense<0.000000e+00> : vector<8xf32>
    %113 = vector.multi_reduction <add>, %112, %cst_45 [1] : vector<8x8xf32> to vector<8xf32>
    %114 = vector.shape_cast %113 : vector<8xf32> to vector<8x1xf32>
    %115 = tpu.reciprocal %114 {approx = true} : vector<8x1xf32> -> vector<8x1xf32>
    %116 = vector.broadcast %115 : vector<8x1xf32> to vector<8x8xf32>
    %117 = arith.mulf %112, %116 : vector<8x8xf32>
    %cst_46 = arith.constant dense<0.000000e+00> : vector<8x16xf32>
    %118 = tpu.matmul %117, %104, %cst_46 {dimension_numbers = #tpu.dot_dimension_numbers<[1], [0], [0], [1], [0, 0, 1, 1], [], []>} : vector<8x8xf32>, vector<8x16xf32>, vector<8x16xf32> -> vector<8x16xf32>
    %119 = vector.extract_strided_slice %33 {offsets = [0, 208], sizes = [8, 16], strides = [1, 1]} : vector<8x768xf32> to vector<8x16xf32>
    %120 = vector.extract_strided_slice %33 {offsets = [0, 240], sizes = [8, 16], strides = [1, 1]} : vector<8x768xf32> to vector<8x16xf32>
    %121 = vector.extract_strided_slice %33 {offsets = [0, 272], sizes = [8, 16], strides = [1, 1]} : vector<8x768xf32> to vector<8x16xf32>
    %cst_47 = arith.constant dense<0.000000e+00> : vector<8x8xf32>
    %122 = tpu.matmul %119, %120, %cst_47 {dimension_numbers = #tpu.dot_dimension_numbers<[1], [1], [0], [0], [0, 0, 1, 0], [], []>} : vector<8x16xf32>, vector<8x16xf32>, vector<8x8xf32> -> vector<8x8xf32>
    %cst_48 = arith.constant 2.500000e-01 : f32
    %123 = vector.broadcast %cst_48 : f32 to vector<8x8xf32>
    %124 = arith.mulf %122, %123 : vector<8x8xf32>
    %cst_49 = arith.constant dense<0xFF800000> : vector<8xf32>
    %125 = vector.multi_reduction <maximumf>, %124, %cst_49 [1] : vector<8x8xf32> to vector<8xf32>
    %126 = vector.shape_cast %125 : vector<8xf32> to vector<8x1xf32>
    %127 = vector.broadcast %126 : vector<8x1xf32> to vector<8x8xf32>
    %128 = arith.subf %124, %127 : vector<8x8xf32>
    %129 = math.exp %128 : vector<8x8xf32>
    %cst_50 = arith.constant dense<0.000000e+00> : vector<8xf32>
    %130 = vector.multi_reduction <add>, %129, %cst_50 [1] : vector<8x8xf32> to vector<8xf32>
    %131 = vector.shape_cast %130 : vector<8xf32> to vector<8x1xf32>
    %132 = tpu.reciprocal %131 {approx = true} : vector<8x1xf32> -> vector<8x1xf32>
    %133 = vector.broadcast %132 : vector<8x1xf32> to vector<8x8xf32>
    %134 = arith.mulf %129, %133 : vector<8x8xf32>
    %cst_51 = arith.constant dense<0.000000e+00> : vector<8x16xf32>
    %135 = tpu.matmul %134, %121, %cst_51 {dimension_numbers = #tpu.dot_dimension_numbers<[1], [0], [0], [1], [0, 0, 1, 1], [], []>} : vector<8x8xf32>, vector<8x16xf32>, vector<8x16xf32> -> vector<8x16xf32>
    %136 = vector.extract_strided_slice %33 {offsets = [0, 288], sizes = [8, 16], strides = [1, 1]} : vector<8x768xf32> to vector<8x16xf32>
    %137 = vector.extract_strided_slice %33 {offsets = [0, 320], sizes = [8, 16], strides = [1, 1]} : vector<8x768xf32> to vector<8x16xf32>
    %138 = vector.extract_strided_slice %33 {offsets = [0, 352], sizes = [8, 16], strides = [1, 1]} : vector<8x768xf32> to vector<8x16xf32>
    %cst_52 = arith.constant dense<0.000000e+00> : vector<8x8xf32>
    %139 = tpu.matmul %136, %137, %cst_52 {dimension_numbers = #tpu.dot_dimension_numbers<[1], [1], [0], [0], [0, 0, 1, 0], [], []>} : vector<8x16xf32>, vector<8x16xf32>, vector<8x8xf32> -> vector<8x8xf32>
    %cst_53 = arith.constant 2.500000e-01 : f32
    %140 = vector.broadcast %cst_53 : f32 to vector<8x8xf32>
    %141 = arith.mulf %139, %140 : vector<8x8xf32>
    %cst_54 = arith.constant dense<0xFF800000> : vector<8xf32>
    %142 = vector.multi_reduction <maximumf>, %141, %cst_54 [1] : vector<8x8xf32> to vector<8xf32>
    %143 = vector.shape_cast %142 : vector<8xf32> to vector<8x1xf32>
    %144 = vector.broadcast %143 : vector<8x1xf32> to vector<8x8xf32>
    %145 = arith.subf %141, %144 : vector<8x8xf32>
    %146 = math.exp %145 : vector<8x8xf32>
    %cst_55 = arith.constant dense<0.000000e+00> : vector<8xf32>
    %147 = vector.multi_reduction <add>, %146, %cst_55 [1] : vector<8x8xf32> to vector<8xf32>
    %148 = vector.shape_cast %147 : vector<8xf32> to vector<8x1xf32>
    %149 = tpu.reciprocal %148 {approx = true} : vector<8x1xf32> -> vector<8x1xf32>
    %150 = vector.broadcast %149 : vector<8x1xf32> to vector<8x8xf32>
    %151 = arith.mulf %146, %150 : vector<8x8xf32>
    %cst_56 = arith.constant dense<0.000000e+00> : vector<8x16xf32>
    %152 = tpu.matmul %151, %138, %cst_56 {dimension_numbers = #tpu.dot_dimension_numbers<[1], [0], [0], [1], [0, 0, 1, 1], [], []>} : vector<8x8xf32>, vector<8x16xf32>, vector<8x16xf32> -> vector<8x16xf32>
    %153 = vector.extract_strided_slice %33 {offsets = [0, 304], sizes = [8, 16], strides = [1, 1]} : vector<8x768xf32> to vector<8x16xf32>
    %154 = vector.extract_strided_slice %33 {offsets = [0, 336], sizes = [8, 16], strides = [1, 1]} : vector<8x768xf32> to vector<8x16xf32>
    %155 = vector.extract_strided_slice %33 {offsets = [0, 368], sizes = [8, 16], strides = [1, 1]} : vector<8x768xf32> to vector<8x16xf32>
    %cst_57 = arith.constant dense<0.000000e+00> : vector<8x8xf32>
    %156 = tpu.matmul %153, %154, %cst_57 {dimension_numbers = #tpu.dot_dimension_numbers<[1], [1], [0], [0], [0, 0, 1, 0], [], []>} : vector<8x16xf32>, vector<8x16xf32>, vector<8x8xf32> -> vector<8x8xf32>
    %cst_58 = arith.constant 2.500000e-01 : f32
    %157 = vector.broadcast %cst_58 : f32 to vector<8x8xf32>
    %158 = arith.mulf %156, %157 : vector<8x8xf32>
    %cst_59 = arith.constant dense<0xFF800000> : vector<8xf32>
    %159 = vector.multi_reduction <maximumf>, %158, %cst_59 [1] : vector<8x8xf32> to vector<8xf32>
    %160 = vector.shape_cast %159 : vector<8xf32> to vector<8x1xf32>
    %161 = vector.broadcast %160 : vector<8x1xf32> to vector<8x8xf32>
    %162 = arith.subf %158, %161 : vector<8x8xf32>
    %163 = math.exp %162 : vector<8x8xf32>
    %cst_60 = arith.constant dense<0.000000e+00> : vector<8xf32>
    %164 = vector.multi_reduction <add>, %163, %cst_60 [1] : vector<8x8xf32> to vector<8xf32>
    %165 = vector.shape_cast %164 : vector<8xf32> to vector<8x1xf32>
    %166 = tpu.reciprocal %165 {approx = true} : vector<8x1xf32> -> vector<8x1xf32>
    %167 = vector.broadcast %166 : vector<8x1xf32> to vector<8x8xf32>
    %168 = arith.mulf %163, %167 : vector<8x8xf32>
    %cst_61 = arith.constant dense<0.000000e+00> : vector<8x16xf32>
    %169 = tpu.matmul %168, %155, %cst_61 {dimension_numbers = #tpu.dot_dimension_numbers<[1], [0], [0], [1], [0, 0, 1, 1], [], []>} : vector<8x8xf32>, vector<8x16xf32>, vector<8x16xf32> -> vector<8x16xf32>
    %170 = vector.extract_strided_slice %33 {offsets = [0, 384], sizes = [8, 16], strides = [1, 1]} : vector<8x768xf32> to vector<8x16xf32>
    %171 = vector.extract_strided_slice %33 {offsets = [0, 416], sizes = [8, 16], strides = [1, 1]} : vector<8x768xf32> to vector<8x16xf32>
    %172 = vector.extract_strided_slice %33 {offsets = [0, 448], sizes = [8, 16], strides = [1, 1]} : vector<8x768xf32> to vector<8x16xf32>
    %cst_62 = arith.constant dense<0.000000e+00> : vector<8x8xf32>
    %173 = tpu.matmul %170, %171, %cst_62 {dimension_numbers = #tpu.dot_dimension_numbers<[1], [1], [0], [0], [0, 0, 1, 0], [], []>} : vector<8x16xf32>, vector<8x16xf32>, vector<8x8xf32> -> vector<8x8xf32>
    %cst_63 = arith.constant 2.500000e-01 : f32
    %174 = vector.broadcast %cst_63 : f32 to vector<8x8xf32>
    %175 = arith.mulf %173, %174 : vector<8x8xf32>
    %cst_64 = arith.constant dense<0xFF800000> : vector<8xf32>
    %176 = vector.multi_reduction <maximumf>, %175, %cst_64 [1] : vector<8x8xf32> to vector<8xf32>
    %177 = vector.shape_cast %176 : vector<8xf32> to vector<8x1xf32>
    %178 = vector.broadcast %177 : vector<8x1xf32> to vector<8x8xf32>
    %179 = arith.subf %175, %178 : vector<8x8xf32>
    %180 = math.exp %179 : vector<8x8xf32>
    %cst_65 = arith.constant dense<0.000000e+00> : vector<8xf32>
    %181 = vector.multi_reduction <add>, %180, %cst_65 [1] : vector<8x8xf32> to vector<8xf32>
    %182 = vector.shape_cast %181 : vector<8xf32> to vector<8x1xf32>
    %183 = tpu.reciprocal %182 {approx = true} : vector<8x1xf32> -> vector<8x1xf32>
    %184 = vector.broadcast %183 : vector<8x1xf32> to vector<8x8xf32>
    %185 = arith.mulf %180, %184 : vector<8x8xf32>
    %cst_66 = arith.constant dense<0.000000e+00> : vector<8x16xf32>
    %186 = tpu.matmul %185, %172, %cst_66 {dimension_numbers = #tpu.dot_dimension_numbers<[1], [0], [0], [1], [0, 0, 1, 1], [], []>} : vector<8x8xf32>, vector<8x16xf32>, vector<8x16xf32> -> vector<8x16xf32>
    %187 = vector.extract_strided_slice %33 {offsets = [0, 400], sizes = [8, 16], strides = [1, 1]} : vector<8x768xf32> to vector<8x16xf32>
    %188 = vector.extract_strided_slice %33 {offsets = [0, 432], sizes = [8, 16], strides = [1, 1]} : vector<8x768xf32> to vector<8x16xf32>
    %189 = vector.extract_strided_slice %33 {offsets = [0, 464], sizes = [8, 16], strides = [1, 1]} : vector<8x768xf32> to vector<8x16xf32>
    %cst_67 = arith.constant dense<0.000000e+00> : vector<8x8xf32>
    %190 = tpu.matmul %187, %188, %cst_67 {dimension_numbers = #tpu.dot_dimension_numbers<[1], [1], [0], [0], [0, 0, 1, 0], [], []>} : vector<8x16xf32>, vector<8x16xf32>, vector<8x8xf32> -> vector<8x8xf32>
    %cst_68 = arith.constant 2.500000e-01 : f32
    %191 = vector.broadcast %cst_68 : f32 to vector<8x8xf32>
    %192 = arith.mulf %190, %191 : vector<8x8xf32>
    %cst_69 = arith.constant dense<0xFF800000> : vector<8xf32>
    %193 = vector.multi_reduction <maximumf>, %192, %cst_69 [1] : vector<8x8xf32> to vector<8xf32>
    %194 = vector.shape_cast %193 : vector<8xf32> to vector<8x1xf32>
    %195 = vector.broadcast %194 : vector<8x1xf32> to vector<8x8xf32>
    %196 = arith.subf %192, %195 : vector<8x8xf32>
    %197 = math.exp %196 : vector<8x8xf32>
    %cst_70 = arith.constant dense<0.000000e+00> : vector<8xf32>
    %198 = vector.multi_reduction <add>, %197, %cst_70 [1] : vector<8x8xf32> to vector<8xf32>
    %199 = vector.shape_cast %198 : vector<8xf32> to vector<8x1xf32>
    %200 = tpu.reciprocal %199 {approx = true} : vector<8x1xf32> -> vector<8x1xf32>
    %201 = vector.broadcast %200 : vector<8x1xf32> to vector<8x8xf32>
    %202 = arith.mulf %197, %201 : vector<8x8xf32>
    %cst_71 = arith.constant dense<0.000000e+00> : vector<8x16xf32>
    %203 = tpu.matmul %202, %189, %cst_71 {dimension_numbers = #tpu.dot_dimension_numbers<[1], [0], [0], [1], [0, 0, 1, 1], [], []>} : vector<8x8xf32>, vector<8x16xf32>, vector<8x16xf32> -> vector<8x16xf32>
    %204 = vector.extract_strided_slice %33 {offsets = [0, 480], sizes = [8, 16], strides = [1, 1]} : vector<8x768xf32> to vector<8x16xf32>
    %205 = vector.extract_strided_slice %33 {offsets = [0, 512], sizes = [8, 16], strides = [1, 1]} : vector<8x768xf32> to vector<8x16xf32>
    %206 = vector.extract_strided_slice %33 {offsets = [0, 544], sizes = [8, 16], strides = [1, 1]} : vector<8x768xf32> to vector<8x16xf32>
    %cst_72 = arith.constant dense<0.000000e+00> : vector<8x8xf32>
    %207 = tpu.matmul %204, %205, %cst_72 {dimension_numbers = #tpu.dot_dimension_numbers<[1], [1], [0], [0], [0, 0, 1, 0], [], []>} : vector<8x16xf32>, vector<8x16xf32>, vector<8x8xf32> -> vector<8x8xf32>
    %cst_73 = arith.constant 2.500000e-01 : f32
    %208 = vector.broadcast %cst_73 : f32 to vector<8x8xf32>
    %209 = arith.mulf %207, %208 : vector<8x8xf32>
    %cst_74 = arith.constant dense<0xFF800000> : vector<8xf32>
    %210 = vector.multi_reduction <maximumf>, %209, %cst_74 [1] : vector<8x8xf32> to vector<8xf32>
    %211 = vector.shape_cast %210 : vector<8xf32> to vector<8x1xf32>
    %212 = vector.broadcast %211 : vector<8x1xf32> to vector<8x8xf32>
    %213 = arith.subf %209, %212 : vector<8x8xf32>
    %214 = math.exp %213 : vector<8x8xf32>
    %cst_75 = arith.constant dense<0.000000e+00> : vector<8xf32>
    %215 = vector.multi_reduction <add>, %214, %cst_75 [1] : vector<8x8xf32> to vector<8xf32>
    %216 = vector.shape_cast %215 : vector<8xf32> to vector<8x1xf32>
    %217 = tpu.reciprocal %216 {approx = true} : vector<8x1xf32> -> vector<8x1xf32>
    %218 = vector.broadcast %217 : vector<8x1xf32> to vector<8x8xf32>
    %219 = arith.mulf %214, %218 : vector<8x8xf32>
    %cst_76 = arith.constant dense<0.000000e+00> : vector<8x16xf32>
    %220 = tpu.matmul %219, %206, %cst_76 {dimension_numbers = #tpu.dot_dimension_numbers<[1], [0], [0], [1], [0, 0, 1, 1], [], []>} : vector<8x8xf32>, vector<8x16xf32>, vector<8x16xf32> -> vector<8x16xf32>
    %221 = vector.extract_strided_slice %33 {offsets = [0, 496], sizes = [8, 16], strides = [1, 1]} : vector<8x768xf32> to vector<8x16xf32>
    %222 = vector.extract_strided_slice %33 {offsets = [0, 528], sizes = [8, 16], strides = [1, 1]} : vector<8x768xf32> to vector<8x16xf32>
    %223 = vector.extract_strided_slice %33 {offsets = [0, 560], sizes = [8, 16], strides = [1, 1]} : vector<8x768xf32> to vector<8x16xf32>
    %cst_77 = arith.constant dense<0.000000e+00> : vector<8x8xf32>
    %224 = tpu.matmul %221, %222, %cst_77 {dimension_numbers = #tpu.dot_dimension_numbers<[1], [1], [0], [0], [0, 0, 1, 0], [], []>} : vector<8x16xf32>, vector<8x16xf32>, vector<8x8xf32> -> vector<8x8xf32>
    %cst_78 = arith.constant 2.500000e-01 : f32
    %225 = vector.broadcast %cst_78 : f32 to vector<8x8xf32>
    %226 = arith.mulf %224, %225 : vector<8x8xf32>
    %cst_79 = arith.constant dense<0xFF800000> : vector<8xf32>
    %227 = vector.multi_reduction <maximumf>, %226, %cst_79 [1] : vector<8x8xf32> to vector<8xf32>
    %228 = vector.shape_cast %227 : vector<8xf32> to vector<8x1xf32>
    %229 = vector.broadcast %228 : vector<8x1xf32> to vector<8x8xf32>
    %230 = arith.subf %226, %229 : vector<8x8xf32>
    %231 = math.exp %230 : vector<8x8xf32>
    %cst_80 = arith.constant dense<0.000000e+00> : vector<8xf32>
    %232 = vector.multi_reduction <add>, %231, %cst_80 [1] : vector<8x8xf32> to vector<8xf32>
    %233 = vector.shape_cast %232 : vector<8xf32> to vector<8x1xf32>
    %234 = tpu.reciprocal %233 {approx = true} : vector<8x1xf32> -> vector<8x1xf32>
    %235 = vector.broadcast %234 : vector<8x1xf32> to vector<8x8xf32>
    %236 = arith.mulf %231, %235 : vector<8x8xf32>
    %cst_81 = arith.constant dense<0.000000e+00> : vector<8x16xf32>
    %237 = tpu.matmul %236, %223, %cst_81 {dimension_numbers = #tpu.dot_dimension_numbers<[1], [0], [0], [1], [0, 0, 1, 1], [], []>} : vector<8x8xf32>, vector<8x16xf32>, vector<8x16xf32> -> vector<8x16xf32>
    %238 = vector.extract_strided_slice %33 {offsets = [0, 576], sizes = [8, 16], strides = [1, 1]} : vector<8x768xf32> to vector<8x16xf32>
    %239 = vector.extract_strided_slice %33 {offsets = [0, 608], sizes = [8, 16], strides = [1, 1]} : vector<8x768xf32> to vector<8x16xf32>
    %240 = vector.extract_strided_slice %33 {offsets = [0, 640], sizes = [8, 16], strides = [1, 1]} : vector<8x768xf32> to vector<8x16xf32>
    %cst_82 = arith.constant dense<0.000000e+00> : vector<8x8xf32>
    %241 = tpu.matmul %238, %239, %cst_82 {dimension_numbers = #tpu.dot_dimension_numbers<[1], [1], [0], [0], [0, 0, 1, 0], [], []>} : vector<8x16xf32>, vector<8x16xf32>, vector<8x8xf32> -> vector<8x8xf32>
    %cst_83 = arith.constant 2.500000e-01 : f32
    %242 = vector.broadcast %cst_83 : f32 to vector<8x8xf32>
    %243 = arith.mulf %241, %242 : vector<8x8xf32>
    %cst_84 = arith.constant dense<0xFF800000> : vector<8xf32>
    %244 = vector.multi_reduction <maximumf>, %243, %cst_84 [1] : vector<8x8xf32> to vector<8xf32>
    %245 = vector.shape_cast %244 : vector<8xf32> to vector<8x1xf32>
    %246 = vector.broadcast %245 : vector<8x1xf32> to vector<8x8xf32>
    %247 = arith.subf %243, %246 : vector<8x8xf32>
    %248 = math.exp %247 : vector<8x8xf32>
    %cst_85 = arith.constant dense<0.000000e+00> : vector<8xf32>
    %249 = vector.multi_reduction <add>, %248, %cst_85 [1] : vector<8x8xf32> to vector<8xf32>
    %250 = vector.shape_cast %249 : vector<8xf32> to vector<8x1xf32>
    %251 = tpu.reciprocal %250 {approx = true} : vector<8x1xf32> -> vector<8x1xf32>
    %252 = vector.broadcast %251 : vector<8x1xf32> to vector<8x8xf32>
    %253 = arith.mulf %248, %252 : vector<8x8xf32>
    %cst_86 = arith.constant dense<0.000000e+00> : vector<8x16xf32>
    %254 = tpu.matmul %253, %240, %cst_86 {dimension_numbers = #tpu.dot_dimension_numbers<[1], [0], [0], [1], [0, 0, 1, 1], [], []>} : vector<8x8xf32>, vector<8x16xf32>, vector<8x16xf32> -> vector<8x16xf32>
    %255 = vector.extract_strided_slice %33 {offsets = [0, 592], sizes = [8, 16], strides = [1, 1]} : vector<8x768xf32> to vector<8x16xf32>
    %256 = vector.extract_strided_slice %33 {offsets = [0, 624], sizes = [8, 16], strides = [1, 1]} : vector<8x768xf32> to vector<8x16xf32>
    %257 = vector.extract_strided_slice %33 {offsets = [0, 656], sizes = [8, 16], strides = [1, 1]} : vector<8x768xf32> to vector<8x16xf32>
    %cst_87 = arith.constant dense<0.000000e+00> : vector<8x8xf32>
    %258 = tpu.matmul %255, %256, %cst_87 {dimension_numbers = #tpu.dot_dimension_numbers<[1], [1], [0], [0], [0, 0, 1, 0], [], []>} : vector<8x16xf32>, vector<8x16xf32>, vector<8x8xf32> -> vector<8x8xf32>
    %cst_88 = arith.constant 2.500000e-01 : f32
    %259 = vector.broadcast %cst_88 : f32 to vector<8x8xf32>
    %260 = arith.mulf %258, %259 : vector<8x8xf32>
    %cst_89 = arith.constant dense<0xFF800000> : vector<8xf32>
    %261 = vector.multi_reduction <maximumf>, %260, %cst_89 [1] : vector<8x8xf32> to vector<8xf32>
    %262 = vector.shape_cast %261 : vector<8xf32> to vector<8x1xf32>
    %263 = vector.broadcast %262 : vector<8x1xf32> to vector<8x8xf32>
    %264 = arith.subf %260, %263 : vector<8x8xf32>
    %265 = math.exp %264 : vector<8x8xf32>
    %cst_90 = arith.constant dense<0.000000e+00> : vector<8xf32>
    %266 = vector.multi_reduction <add>, %265, %cst_90 [1] : vector<8x8xf32> to vector<8xf32>
    %267 = vector.shape_cast %266 : vector<8xf32> to vector<8x1xf32>
    %268 = tpu.reciprocal %267 {approx = true} : vector<8x1xf32> -> vector<8x1xf32>
    %269 = vector.broadcast %268 : vector<8x1xf32> to vector<8x8xf32>
    %270 = arith.mulf %265, %269 : vector<8x8xf32>
    %cst_91 = arith.constant dense<0.000000e+00> : vector<8x16xf32>
    %271 = tpu.matmul %270, %257, %cst_91 {dimension_numbers = #tpu.dot_dimension_numbers<[1], [0], [0], [1], [0, 0, 1, 1], [], []>} : vector<8x8xf32>, vector<8x16xf32>, vector<8x16xf32> -> vector<8x16xf32>
    %272 = vector.extract_strided_slice %33 {offsets = [0, 672], sizes = [8, 16], strides = [1, 1]} : vector<8x768xf32> to vector<8x16xf32>
    %273 = vector.extract_strided_slice %33 {offsets = [0, 704], sizes = [8, 16], strides = [1, 1]} : vector<8x768xf32> to vector<8x16xf32>
    %274 = vector.extract_strided_slice %33 {offsets = [0, 736], sizes = [8, 16], strides = [1, 1]} : vector<8x768xf32> to vector<8x16xf32>
    %cst_92 = arith.constant dense<0.000000e+00> : vector<8x8xf32>
    %275 = tpu.matmul %272, %273, %cst_92 {dimension_numbers = #tpu.dot_dimension_numbers<[1], [1], [0], [0], [0, 0, 1, 0], [], []>} : vector<8x16xf32>, vector<8x16xf32>, vector<8x8xf32> -> vector<8x8xf32>
    %cst_93 = arith.constant 2.500000e-01 : f32
    %276 = vector.broadcast %cst_93 : f32 to vector<8x8xf32>
    %277 = arith.mulf %275, %276 : vector<8x8xf32>
    %cst_94 = arith.constant dense<0xFF800000> : vector<8xf32>
    %278 = vector.multi_reduction <maximumf>, %277, %cst_94 [1] : vector<8x8xf32> to vector<8xf32>
    %279 = vector.shape_cast %278 : vector<8xf32> to vector<8x1xf32>
    %280 = vector.broadcast %279 : vector<8x1xf32> to vector<8x8xf32>
    %281 = arith.subf %277, %280 : vector<8x8xf32>
    %282 = math.exp %281 : vector<8x8xf32>
    %cst_95 = arith.constant dense<0.000000e+00> : vector<8xf32>
    %283 = vector.multi_reduction <add>, %282, %cst_95 [1] : vector<8x8xf32> to vector<8xf32>
    %284 = vector.shape_cast %283 : vector<8xf32> to vector<8x1xf32>
    %285 = tpu.reciprocal %284 {approx = true} : vector<8x1xf32> -> vector<8x1xf32>
    %286 = vector.broadcast %285 : vector<8x1xf32> to vector<8x8xf32>
    %287 = arith.mulf %282, %286 : vector<8x8xf32>
    %cst_96 = arith.constant dense<0.000000e+00> : vector<8x16xf32>
    %288 = tpu.matmul %287, %274, %cst_96 {dimension_numbers = #tpu.dot_dimension_numbers<[1], [0], [0], [1], [0, 0, 1, 1], [], []>} : vector<8x8xf32>, vector<8x16xf32>, vector<8x16xf32> -> vector<8x16xf32>
    %289 = vector.extract_strided_slice %33 {offsets = [0, 688], sizes = [8, 16], strides = [1, 1]} : vector<8x768xf32> to vector<8x16xf32>
    %290 = vector.extract_strided_slice %33 {offsets = [0, 720], sizes = [8, 16], strides = [1, 1]} : vector<8x768xf32> to vector<8x16xf32>
    %291 = vector.extract_strided_slice %33 {offsets = [0, 752], sizes = [8, 16], strides = [1, 1]} : vector<8x768xf32> to vector<8x16xf32>
    %cst_97 = arith.constant dense<0.000000e+00> : vector<8x8xf32>
    %292 = tpu.matmul %289, %290, %cst_97 {dimension_numbers = #tpu.dot_dimension_numbers<[1], [1], [0], [0], [0, 0, 1, 0], [], []>} : vector<8x16xf32>, vector<8x16xf32>, vector<8x8xf32> -> vector<8x8xf32>
    %cst_98 = arith.constant 2.500000e-01 : f32
    %293 = vector.broadcast %cst_98 : f32 to vector<8x8xf32>
    %294 = arith.mulf %292, %293 : vector<8x8xf32>
    %cst_99 = arith.constant dense<0xFF800000> : vector<8xf32>
    %295 = vector.multi_reduction <maximumf>, %294, %cst_99 [1] : vector<8x8xf32> to vector<8xf32>
    %296 = vector.shape_cast %295 : vector<8xf32> to vector<8x1xf32>
    %297 = vector.broadcast %296 : vector<8x1xf32> to vector<8x8xf32>
    %298 = arith.subf %294, %297 : vector<8x8xf32>
    %299 = math.exp %298 : vector<8x8xf32>
    %cst_100 = arith.constant dense<0.000000e+00> : vector<8xf32>
    %300 = vector.multi_reduction <add>, %299, %cst_100 [1] : vector<8x8xf32> to vector<8xf32>
    %301 = vector.shape_cast %300 : vector<8xf32> to vector<8x1xf32>
    %302 = tpu.reciprocal %301 {approx = true} : vector<8x1xf32> -> vector<8x1xf32>
    %303 = vector.broadcast %302 : vector<8x1xf32> to vector<8x8xf32>
    %304 = arith.mulf %299, %303 : vector<8x8xf32>
    %cst_101 = arith.constant dense<0.000000e+00> : vector<8x16xf32>
    %305 = tpu.matmul %304, %291, %cst_101 {dimension_numbers = #tpu.dot_dimension_numbers<[1], [0], [0], [1], [0, 0, 1, 1], [], []>} : vector<8x8xf32>, vector<8x16xf32>, vector<8x16xf32> -> vector<8x16xf32>
    %306 = tpu.concatenate %50, %67, %84, %101, %118, %135, %152, %169, %186, %203, %220, %237, %254, %271, %288, %305 in 1 : vector<8x16xf32>, vector<8x16xf32>, vector<8x16xf32>, vector<8x16xf32>, vector<8x16xf32>, vector<8x16xf32>, vector<8x16xf32>, vector<8x16xf32>, vector<8x16xf32>, vector<8x16xf32>, vector<8x16xf32>, vector<8x16xf32>, vector<8x16xf32>, vector<8x16xf32>, vector<8x16xf32>, vector<8x16xf32> -> vector<8x256xf32>
    %c0_102 = arith.constant 0 : index
    %c0_103 = arith.constant 0 : index
    %307 = vector.load %arg10[%c0_102, %c0_103] : memref<256x256xf32, #tpu.memory_space<vmem>>, vector<256x256xf32>
    %cst_104 = arith.constant dense<0.000000e+00> : vector<8x256xf32>
    %308 = tpu.matmul %306, %307, %cst_104 {dimension_numbers = #tpu.dot_dimension_numbers<[1], [0], [0], [1], [0, 0, 1, 1], [], []>} : vector<8x256xf32>, vector<256x256xf32>, vector<8x256xf32> -> vector<8x256xf32>
    %c0_105 = arith.constant 0 : index
    %c0_106 = arith.constant 0 : index
    %309 = vector.load %arg11[%c0_105, %c0_106] : memref<1x256xf32, #tpu.memory_space<vmem>>, vector<1x256xf32>
    %310 = vector.broadcast %309 : vector<1x256xf32> to vector<8x256xf32>
    %311 = arith.addf %308, %310 : vector<8x256xf32>
    %c0_107 = arith.constant 0 : index
    %c0_108 = arith.constant 0 : index
    %312 = vector.load %arg12[%c0_107, %c0_108] : memref<8x256xf32, #tpu.memory_space<vmem>>, vector<8x256xf32>
    tpu.vector_store %arg12[%c0_107, %c0_108], %311 {strides = array<i32>} : memref<8x256xf32, #tpu.memory_space<vmem>>, vector<8x256xf32>,
    return
  }
  func.func @transform_0(%arg0: i32) -> (i32, i32) {
    %c0_i32 = arith.constant 0 : i32
    %c0_i32_0 = arith.constant 0 : i32
    %c0_i32_1 = arith.constant 0 : i32
    return %c0_i32, %c0_i32_0 : i32, i32
  }
  func.func @transform_1(%arg0: i32) -> (i32, i32) {
    %c0_i32 = arith.constant 0 : i32
    %c0_i32_0 = arith.constant 0 : i32
    %c0_i32_1 = arith.constant 0 : i32
    return %c0_i32, %c0_i32_0 : i32, i32
  }
  func.func @transform_2(%arg0: i32) -> (i32, i32) {
    %c0_i32 = arith.constant 0 : i32
    %c0_i32_0 = arith.constant 0 : i32
    %c0_i32_1 = arith.constant 0 : i32
    return %c0_i32, %c0_i32_0 : i32, i32
  }
  func.func @transform_3(%arg0: i32) -> (i32, i32) {
    %c0_i32 = arith.constant 0 : i32
    %c0_i32_0 = arith.constant 0 : i32
    %c0_i32_1 = arith.constant 0 : i32
    return %c0_i32, %c0_i32_0 : i32, i32
  }
  func.func @transform_4(%arg0: i32) -> (i32, i32) {
    %c0_i32 = arith.constant 0 : i32
    %c0_i32_0 = arith.constant 0 : i32
    %c0_i32_1 = arith.constant 0 : i32
    return %c0_i32, %c0_i32_0 : i32, i32
  }
  func.func @transform_5(%arg0: i32) -> (i32, i32) {
    %c0_i32 = arith.constant 0 : i32
    %c0_i32_0 = arith.constant 0 : i32
    %c0_i32_1 = arith.constant 0 : i32
    return %c0_i32, %c0_i32_0 : i32, i32
  }
  func.func @transform_6(%arg0: i32) -> (i32, i32) {
    %c0_i32 = arith.constant 0 : i32
    %c0_i32_0 = arith.constant 0 : i32
    %c0_i32_1 = arith.constant 0 : i32
    return %c0_i32, %c0_i32_0 : i32, i32
  }
  func.func @transform_7(%arg0: i32) -> (i32, i32) {
    %c0_i32 = arith.constant 0 : i32
    return %arg0, %arg0 : i32, i32
  }
  func.func @transform_8(%arg0: i32) -> (i32, i32) {
    %c0_i32 = arith.constant 0 : i32
    %c0_i32_0 = arith.constant 0 : i32
    return %c0_i32, %arg0 : i32, i32
  }
  func.func @transform_9(%arg0: i32) -> (i32, i32) {
    %c0_i32 = arith.constant 0 : i32
    return %arg0, %arg0 : i32, i32
  }
  func.func @transform_10(%arg0: i32) -> (i32, i32) {
    %c0_i32 = arith.constant 0 : i32
    %c0_i32_0 = arith.constant 0 : i32
    return %c0_i32, %arg0 : i32, i32
  }
  func.func @transform_11(%arg0: i32) -> (i32, i32) {
    %c0_i32 = arith.constant 0 : i32
    %c0_i32_0 = arith.constant 0 : i32
    return %c0_i32, %arg0 : i32, i32
  }
}

</mosaic_0001>

<llo_original>
// kernel: attention_gcn_forward.1
$region0: #{attention_gcn_forward.1}
  #allocation0 [shape = 'u32[]', space=smem, size = 0x4, offset = 0x4, fixed_abs, tag = 'smem constant byte address 0x4 - core index']
  #allocation1 [shape = 'u32[72,128]{1,0:T(1,128)}', space=vmem, size = 0x9000, scoped, tag = 'internal scratch']
  #allocation2 [shape = 'f32[64,32]{1,0:T(8,128)}', space=vmem, size = 0x8000, scoped, tag = 'scratch operand']
  %s0 = inlined_call_operand.vmem [shape: f32[64,4], index: 0, kind: input, shape index: {}]
  %s1 = inlined_call_operand.vmem [shape: f32[64,64], index: 1, kind: input, shape index: {}]
  %s2 = inlined_call_operand.vmem [shape: f32[64,1], index: 2, kind: input, shape index: {}]
  %s3 = inlined_call_operand.vmem [shape: f32[4,32], index: 3, kind: input, shape index: {}]
  %s4 = inlined_call_operand.vmem [shape: f32[1,32], index: 4, kind: input, shape index: {}]
  %s5 = inlined_call_operand.vmem [shape: f32[32,32], index: 5, kind: input, shape index: {}]
  %s6 = inlined_call_operand.vmem [shape: f32[1,32], index: 6, kind: input, shape index: {}]
  %s7 = inlined_call_operand.hbm [shape: f32[256,768], index: 7, kind: input, shape index: {}]
  %s8 = inlined_call_operand.vmem [shape: f32[8,768], index: 8, kind: input, shape index: {}]
  %s9 = inlined_call_operand.vmem [shape: f32[256,256], index: 9, kind: input, shape index: {}]
  %s10 = inlined_call_operand.vmem [shape: f32[1,256], index: 10, kind: input, shape index: {}]
  %s11 = inlined_call_operand.vmem [shape: f32[8,256], index: 11, kind: output, shape index: {}]
  %s12 = sld [smem:[#allocation0]]
  $region58: #{attention_gcn_forward.1} parent=0
    _
  %s14 = ssub.s32 1, %s12
  %s15 = scalar_select 0, %s14, %s12
  $region1: #{attention_gcn_forward.1} parent=0
    #allocation3 [shape = 'u8[786432]{0}', space=vmem, size = 0xc0000, scoped, tag = 'input window, operand 7, single buffered']
    #allocation4 [shape = 's32[1]{0}', space=sflag, size = 0x4, scoped, tag = 'scoped memory for attention_gcn_forward.1']
    %16 = vsyncpa [#allocation4], 0
    // Predicated region
    $region2: #{attention_gcn_forward.1} parent=1 // pred_check
      _
    $region3: #{attention_gcn_forward.1} parent=1 // pred_check_branch
      %18 = sbr.rel (0) target = $region5
    $region4: #{attention_gcn_forward.1} parent=1 // pred_region
      _
    $region5: #{attention_gcn_forward.1} parent=1 // pred_fallthru
      _
    // Predicated region
    $region6: #{attention_gcn_forward.1} parent=1 // pred_check
      _
    $region7: #{attention_gcn_forward.1} parent=1 // pred_check_branch
      %20 = sbr.rel (0) target = $region9
    $region8: #{attention_gcn_forward.1} parent=1 // pred_region
      _
    $region9: #{attention_gcn_forward.1} parent=1 // pred_fallthru
      _
    // Predicated region
    $region10: #{attention_gcn_forward.1} parent=1 // pred_check
      _
    $region11: #{attention_gcn_forward.1} parent=1 // pred_check_branch
      %22 = sbr.rel (0) target = $region13
    $region12: #{attention_gcn_forward.1} parent=1 // pred_region
      _
    $region13: #{attention_gcn_forward.1} parent=1 // pred_fallthru
      _
    // Predicated region
    $region14: #{attention_gcn_forward.1} parent=1 // pred_check
      _
    $region15: #{attention_gcn_forward.1} parent=1 // pred_check_branch
      %24 = sbr.rel (0) target = $region17
    $region16: #{attention_gcn_forward.1} parent=1 // pred_region
      _
    $region17: #{attention_gcn_forward.1} parent=1 // pred_fallthru
      _
    // Predicated region
    $region18: #{attention_gcn_forward.1} parent=1 // pred_check
      _
    $region19: #{attention_gcn_forward.1} parent=1 // pred_check_branch
      %26 = sbr.rel (0) target = $region21
    $region20: #{attention_gcn_forward.1} parent=1 // pred_region
      _
    $region21: #{attention_gcn_forward.1} parent=1 // pred_fallthru
      _
    // Predicated region
    $region22: #{attention_gcn_forward.1} parent=1 // pred_check
      _
    $region23: #{attention_gcn_forward.1} parent=1 // pred_check_branch
      %28 = sbr.rel (0) target = $region25
    $region24: #{attention_gcn_forward.1} parent=1 // pred_region
      _
    $region25: #{attention_gcn_forward.1} parent=1 // pred_fallthru
      _
    // Predicated region
    $region26: #{attention_gcn_forward.1} parent=1 // pred_check
      _
    $region27: #{attention_gcn_forward.1} parent=1 // pred_check_branch
      %30 = sbr.rel (0) target = $region29
    $region28: #{attention_gcn_forward.1} parent=1 // pred_region
      _
    $region29: #{attention_gcn_forward.1} parent=1 // pred_fallthru
      _
    // Predicated region
    $region30: #{attention_gcn_forward.1} parent=1 // pred_check
      _
    $region31: #{attention_gcn_forward.1} parent=1 // pred_check_branch
      %32 = sbr.rel (0) target = $region33
    $region32: #{attention_gcn_forward.1} parent=1 // pred_region
      %34 = vsyncadd [#allocation4], 0
      %s35 = sshll.u32 %s7, 4
      %s36 = int_to_ptr.hbm [resolvable:$true] %s35
      %s37 = sshll.u32 [#allocation3], 4
      %s38 = int_to_ptr.vmem [resolvable:$true] %s37
      %43 = dma.hbm_to_vmem [thread:$0]  %s36, 24576, %s38, [#allocation4], 768, 768, 48
    $region33: #{attention_gcn_forward.1} parent=1 // pred_fallthru
      _
    // Predicated region
    $region34: #{attention_gcn_forward.1} parent=1 // pred_check
      _
    $region35: #{attention_gcn_forward.1} parent=1 // pred_check_branch
      %45 = sbr.rel (0) target = $region37
    $region36: #{attention_gcn_forward.1} parent=1 // pred_region
      _
    $region37: #{attention_gcn_forward.1} parent=1 // pred_fallthru
      _
    // Predicated region
    $region38: #{attention_gcn_forward.1} parent=1 // pred_check
      _
    $region39: #{attention_gcn_forward.1} parent=1 // pred_check_branch
      %47 = sbr.rel (0) target = $region41
    $region40: #{attention_gcn_forward.1} parent=1 // pred_region
      _
    $region41: #{attention_gcn_forward.1} parent=1 // pred_fallthru
      _
    // Predicated region
    $region42: #{attention_gcn_forward.1} parent=1 // pred_check
      _
    $region43: #{attention_gcn_forward.1} parent=1 // pred_check_branch
      %49 = sbr.rel (0) target = $region45
    $region44: #{attention_gcn_forward.1} parent=1 // pred_region
      _
    $region45: #{attention_gcn_forward.1} parent=1 // pred_fallthru
      _
    // Predicated region
    $region46: #{attention_gcn_forward.1} parent=1 // pred_check
      _
    $region47: #{attention_gcn_forward.1} parent=1 // pred_check_branch
      %51 = sbr.rel (0) target = $region49
    $region48: #{attention_gcn_forward.1} parent=1 // pred_region
      %53 = dma.done [#allocation4], 24576
    $region49: #{attention_gcn_forward.1} parent=1 // pred_fallthru
      _
    %v54 = vld [vmem:[%s2] sm:$0xff]
    %v55 = vld [vmem:[%s2 + $0x8] sm:$0xff]
    %v56 = vld [vmem:[%s2 + $0x10] sm:$0xff]
    %v57 = vld [vmem:[%s2 + $0x18] sm:$0xff]
    %v58 = vld [vmem:[%s2 + $0x20] sm:$0xff]
    %v59 = vld [vmem:[%s2 + $0x28] sm:$0xff]
    %v60 = vld [vmem:[%s2 + $0x30] sm:$0xff]
    %v61 = vld [vmem:[%s2 + $0x38] sm:$0xff]
    %v62 = vld [vmem:[%s1] sm:$0xff]
    %v63 = vld [vmem:[%s1 + $0x8] sm:$0xff]
    %v64 = vld [vmem:[%s1 + $0x10] sm:$0xff]
    %v65 = vld [vmem:[%s1 + $0x18] sm:$0xff]
    %v66 = vld [vmem:[%s1 + $0x20] sm:$0xff]
    %v67 = vld [vmem:[%s1 + $0x28] sm:$0xff]
    %v68 = vld [vmem:[%s1 + $0x30] sm:$0xff]
    %v69 = vld [vmem:[%s1 + $0x38] sm:$0xff]
    %v70 = vld [vmem:[%s0] sm:$0xff]
    %v71 = vld [vmem:[%s0 + $0x8] sm:$0xff]
    %v72 = vld [vmem:[%s0 + $0x10] sm:$0xff]
    %v73 = vld [vmem:[%s0 + $0x18] sm:$0xff]
    %v74 = vld [vmem:[%s0 + $0x20] sm:$0xff]
    %v75 = vld [vmem:[%s0 + $0x28] sm:$0xff]
    %v76 = vld [vmem:[%s0 + $0x30] sm:$0xff]
    %v77 = vld [vmem:[%s0 + $0x38] sm:$0xff]
    %v78 = vld [vmem:[%s3] sm:$0xf]
    %vm79 = vcmask 31744
    %v81 = vsel %vm79, %v70, 0
    %v84 = vsel %vm79, %v71, 0
    %v87 = vsel %vm79, %v72, 0
    %v90 = vsel %vm79, %v73, 0
    %v93 = vsel %vm79, %v74, 0
    %v96 = vsel %vm79, %v75, 0
    %v99 = vsel %vm79, %v76, 0
    %v102 = vsel %vm79, %v77, 0
    %vm104 = vcmask 1043456
    %v106 = vsel %vm104, %v78, 0
    %108 = vmatpush.msra.mxu0 0.0
    %109 = vmatpush.msra.mxu0 0.0
    %110 = vmatpush.msra.mxu0 0.0
    %111 = vmatpush.msra.mxu0 0.0
    %112 = vmatpush.msra.mxu0 0.0
    %113 = vmatpush.msra.mxu0 0.0
    %114 = vmatpush.msra.mxu0 0.0
    %115 = vmatpush.msra.mxu0 0.0
    %116 = vmatpush.msra.mxu0 0.0
    %117 = vmatpush.msra.mxu0 0.0
    %118 = vmatpush.msra.mxu0 0.0
    %119 = vmatpush.msra.mxu0 0.0
    %120 = vmatpush.msra.mxu0 0.0
    %121 = vmatpush.msra.mxu0 0.0
    %122 = vmatpush.msra.mxu0 0.0
    %123 = vmatpush.msra.mxu0 %v106
    %124 = vmatmul.f32.gmra.mxu0 %v81
    %v125 = vpop.f32.mrf.mxu0
    %v126 = vadd.f32 0.0, %v125
    %127 = vmatmul.f32.gmra.mxu0 %v84
    %v128 = vpop.f32.mrf.mxu0
    %v129 = vadd.f32 0.0, %v128
    %130 = vmatmul.f32.gmra.mxu0 %v87
    %v131 = vpop.f32.mrf.mxu0
    %v132 = vadd.f32 0.0, %v131
    %133 = vmatmul.f32.gmra.mxu0 %v90
    %v134 = vpop.f32.mrf.mxu0
    %v135 = vadd.f32 0.0, %v134
    %136 = vmatmul.f32.gmra.mxu0 %v93
    %v137 = vpop.f32.mrf.mxu0
    %v138 = vadd.f32 0.0, %v137
    %139 = vmatmul.f32.gmra.mxu0 %v96
    %v140 = vpop.f32.mrf.mxu0
    %v141 = vadd.f32 0.0, %v140
    %142 = vmatmul.f32.gmra.mxu0 %v99
    %v143 = vpop.f32.mrf.mxu0
    %v144 = vadd.f32 0.0, %v143
    %145 = vmatmul.f32.gmra.mxu0 %v102
    %v146 = vpop.f32.mrf.mxu0
    %v147 = vadd.f32 0.0, %v146
    %148 = vdwg.mxu0
    %v149 = vld [vmem:[%s4] sm:$0x1]
    %v151 = vperm.slane %v149, 0
    %vm153 = vcmask 523264
    %v155 = vsel %vm153, %v62, 0
    %v158 = vsel %vm153, %v63, 0
    %v161 = vsel %vm153, %v64, 0
    %v164 = vsel %vm153, %v65, 0
    %v167 = vsel %vm153, %v66, 0
    %v170 = vsel %vm153, %v67, 0
    %v173 = vsel %vm153, %v68, 0
    %v176 = vsel %vm153, %v69, 0
    %178 = vmatpush.msra.mxu0 0.0
    %179 = vmatpush.msra.mxu0 0.0
    %180 = vmatpush.msra.mxu0 0.0
    %181 = vmatpush.msra.mxu0 0.0
    %182 = vmatpush.msra.mxu0 0.0
    %183 = vmatpush.msra.mxu0 0.0
    %184 = vmatpush.msra.mxu0 0.0
    %185 = vmatpush.msra.mxu0 0.0
    %186 = vmatpush.msra.mxu0 %v147
    %187 = vmatpush.msra.mxu0 %v144
    %188 = vmatpush.msra.mxu0 %v141
    %189 = vmatpush.msra.mxu0 %v138
    %190 = vmatpush.msra.mxu0 %v135
    %191 = vmatpush.msra.mxu0 %v132
    %192 = vmatpush.msra.mxu0 %v129
    %193 = vmatpush.msra.mxu0 %v126
    %194 = vmatmul.f32.gmra.mxu0 %v155
    %v195 = vpop.f32.mrf.mxu0
    %v196 = vadd.f32 %v151, %v195
    %197 = vmatmul.f32.gmra.mxu0 %v158
    %v198 = vpop.f32.mrf.mxu0
    %v199 = vadd.f32 %v151, %v198
    %200 = vmatmul.f32.gmra.mxu0 %v161
    %v201 = vpop.f32.mrf.mxu0
    %v202 = vadd.f32 %v151, %v201
    %203 = vmatmul.f32.gmra.mxu0 %v164
    %v204 = vpop.f32.mrf.mxu0
    %v205 = vadd.f32 %v151, %v204
    %206 = vmatmul.f32.gmra.mxu0 %v167
    %v207 = vpop.f32.mrf.mxu0
    %v208 = vadd.f32 %v151, %v207
    %209 = vmatmul.f32.gmra.mxu0 %v170
    %v210 = vpop.f32.mrf.mxu0
    %v211 = vadd.f32 %v151, %v210
    %212 = vmatmul.f32.gmra.mxu0 %v173
    %v213 = vpop.f32.mrf.mxu0
    %v214 = vadd.f32 %v151, %v213
    %215 = vmatmul.f32.gmra.mxu0 %v176
    %v216 = vpop.f32.mrf.mxu0
    %v217 = vadd.f32 %v151, %v216
    %218 = vdwg.mxu0
    %v219 = vmax.f32 %v196, 0.0
    %v220 = vmax.f32 %v199, 0.0
    %v221 = vmax.f32 %v202, 0.0
    %v222 = vmax.f32 %v205, 0.0
    %v223 = vmax.f32 %v208, 0.0
    %v224 = vmax.f32 %v211, 0.0
    %v225 = vmax.f32 %v214, 0.0
    %v226 = vmax.f32 %v217, 0.0
    %228 = vset.pattern.permute.xlu0 0
    %229 = vperm.xlu0 %228, %v54
    %v230 = vpop.permute.xlu0 %229
    %233 = vset.pattern.permute.xlu0 0
    %234 = vperm.xlu0 %233, %v55
    %v235 = vpop.permute.xlu0 %234
    %238 = vset.pattern.permute.xlu0 0
    %239 = vperm.xlu0 %238, %v56
    %v240 = vpop.permute.xlu0 %239
    %243 = vset.pattern.permute.xlu0 0
    %244 = vperm.xlu0 %243, %v57
    %v245 = vpop.permute.xlu0 %244
    %248 = vset.pattern.permute.xlu0 0
    %249 = vperm.xlu0 %248, %v58
    %v250 = vpop.permute.xlu0 %249
    %253 = vset.pattern.permute.xlu0 0
    %254 = vperm.xlu0 %253, %v59
    %v255 = vpop.permute.xlu0 %254
    %258 = vset.pattern.permute.xlu0 0
    %259 = vperm.xlu0 %258, %v60
    %v260 = vpop.permute.xlu0 %259
    %263 = vset.pattern.permute.xlu0 0
    %264 = vperm.xlu0 %263, %v61
    %v265 = vpop.permute.xlu0 %264
    %v267 = vmul.f32 %v230, %v219
    %v268 = vmul.f32 %v235, %v220
    %v269 = vmul.f32 %v240, %v221
    %v270 = vmul.f32 %v245, %v222
    %v271 = vmul.f32 %v250, %v223
    %v272 = vmul.f32 %v255, %v224
    %v273 = vmul.f32 %v260, %v225
    %v274 = vmul.f32 %v265, %v226
    %v275 = vld [vmem:[%s5] sm:$0xff]
    %v276 = vld [vmem:[%s5 + $0x8] sm:$0xff]
    %v277 = vld [vmem:[%s5 + $0x10] sm:$0xff]
    %v278 = vld [vmem:[%s5 + $0x18] sm:$0xff]
    %vm279 = vcmask 261120
    %v281 = vsel %vm279, %v267, 0
    %v284 = vsel %vm279, %v268, 0
    %v287 = vsel %vm279, %v269, 0
    %v290 = vsel %vm279, %v270, 0
    %v293 = vsel %vm279, %v271, 0
    %v296 = vsel %vm279, %v272, 0
    %v299 = vsel %vm279, %v273, 0
    %v302 = vsel %vm279, %v274, 0
    %304 = vmatpush.msra.mxu0 0.0
    %305 = vmatpush.msra.mxu0 0.0
    %306 = vmatpush.msra.mxu0 0.0
    %307 = vmatpush.msra.mxu0 0.0
    %308 = vmatpush.msra.mxu0 0.0
    %309 = vmatpush.msra.mxu0 0.0
    %310 = vmatpush.msra.mxu0 0.0
    %311 = vmatpush.msra.mxu0 0.0
    %312 = vmatpush.msra.mxu0 0.0
    %313 = vmatpush.msra.mxu0 0.0
    %314 = vmatpush.msra.mxu0 0.0
    %315 = vmatpush.msra.mxu0 0.0
    %316 = vmatpush.msra.mxu0 %v278
    %317 = vmatpush.msra.mxu0 %v277
    %318 = vmatpush.msra.mxu0 %v276
    %319 = vmatpush.msra.mxu0 %v275
    %320 = vmatmul.f32.gmra.mxu0 %v281
    %v321 = vpop.f32.mrf.mxu0
    %v322 = vadd.f32 0.0, %v321
    %323 = vmatmul.f32.gmra.mxu0 %v284
    %v324 = vpop.f32.mrf.mxu0
    %v325 = vadd.f32 0.0, %v324
    %326 = vmatmul.f32.gmra.mxu0 %v287
    %v327 = vpop.f32.mrf.mxu0
    %v328 = vadd.f32 0.0, %v327
    %329 = vmatmul.f32.gmra.mxu0 %v290
    %v330 = vpop.f32.mrf.mxu0
    %v331 = vadd.f32 0.0, %v330
    %332 = vmatmul.f32.gmra.mxu0 %v293
    %v333 = vpop.f32.mrf.mxu0
    %v334 = vadd.f32 0.0, %v333
    %335 = vmatmul.f32.gmra.mxu0 %v296
    %v336 = vpop.f32.mrf.mxu0
    %v337 = vadd.f32 0.0, %v336
    %338 = vmatmul.f32.gmra.mxu0 %v299
    %v339 = vpop.f32.mrf.mxu0
    %v340 = vadd.f32 0.0, %v339
    %341 = vmatmul.f32.gmra.mxu0 %v302
    %v342 = vpop.f32.mrf.mxu0
    %v343 = vadd.f32 0.0, %v342
    %344 = vdwg.mxu0
    %v345 = vld [vmem:[%s6] sm:$0x1]
    %v347 = vperm.slane %v345, 0
    %349 = vmatpush.msra.mxu0 0.0
    %350 = vmatpush.msra.mxu0 0.0
    %351 = vmatpush.msra.mxu0 0.0
    %352 = vmatpush.msra.mxu0 0.0
    %353 = vmatpush.msra.mxu0 0.0
    %354 = vmatpush.msra.mxu0 0.0
    %355 = vmatpush.msra.mxu0 0.0
    %356 = vmatpush.msra.mxu0 0.0
    %357 = vmatpush.msra.mxu0 %v343
    %358 = vmatpush.msra.mxu0 %v340
    %359 = vmatpush.msra.mxu0 %v337
    %360 = vmatpush.msra.mxu0 %v334
    %361 = vmatpush.msra.mxu0 %v331
    %362 = vmatpush.msra.mxu0 %v328
    %363 = vmatpush.msra.mxu0 %v325
    %364 = vmatpush.msra.mxu0 %v322
    %365 = vmatmul.f32.gmra.mxu0 %v155
    %v366 = vpop.f32.mrf.mxu0
    %v367 = vadd.f32 %v347, %v366
    %368 = vmatmul.f32.gmra.mxu0 %v158
    %v369 = vpop.f32.mrf.mxu0
    %v370 = vadd.f32 %v347, %v369
    %371 = vmatmul.f32.gmra.mxu0 %v161
    %v372 = vpop.f32.mrf.mxu0
    %v373 = vadd.f32 %v347, %v372
    %374 = vmatmul.f32.gmra.mxu0 %v164
    %v375 = vpop.f32.mrf.mxu0
    %v376 = vadd.f32 %v347, %v375
    %377 = vmatmul.f32.gmra.mxu0 %v167
    %v378 = vpop.f32.mrf.mxu0
    %v379 = vadd.f32 %v347, %v378
    %380 = vmatmul.f32.gmra.mxu0 %v170
    %v381 = vpop.f32.mrf.mxu0
    %v382 = vadd.f32 %v347, %v381
    %383 = vmatmul.f32.gmra.mxu0 %v173
    %v384 = vpop.f32.mrf.mxu0
    %v385 = vadd.f32 %v347, %v384
    %386 = vmatmul.f32.gmra.mxu0 %v176
    %v387 = vpop.f32.mrf.mxu0
    %v388 = vadd.f32 %v347, %v387
    %389 = vdwg.mxu0
    %v390 = vmul.f32 %v230, %v367
    %v391 = vmul.f32 %v235, %v370
    %v392 = vmul.f32 %v240, %v373
    %v393 = vmul.f32 %v245, %v376
    %v394 = vmul.f32 %v250, %v379
    %v395 = vmul.f32 %v255, %v382
    %v396 = vmul.f32 %v260, %v385
    %v397 = vmul.f32 %v265, %v388
    %399 = vrot.lane.b32.xlu0 %v391, 32
    %v400 = vpop.permute.xlu0 %399
    %403 = vrot.lane.b32.xlu0 %v392, 64
    %v404 = vpop.permute.xlu0 %403
    %407 = vrot.lane.b32.xlu0 %v393, 96
    %v408 = vpop.permute.xlu0 %407
    %411 = vrot.lane.b32.xlu0 %v395, 32
    %v412 = vpop.permute.xlu0 %411
    %415 = vrot.lane.b32.xlu0 %v396, 64
    %v416 = vpop.permute.xlu0 %415
    %419 = vrot.lane.b32.xlu0 %v397, 96
    %v420 = vpop.permute.xlu0 %419
    %v422 = vsel %vm279, %v390, %v400
    %v423 = vsel %vm153, %v422, %v404
    %vm424 = vcmask 785408
    %v425 = vsel %vm424, %v423, %v408
    %v426 = vsel %vm279, %v394, %v412
    %v427 = vsel %vm153, %v426, %v416
    %v428 = vsel %vm424, %v427, %v420
    %v429 = vld [vmem:[#allocation3] sm:$0xff]
    %v430 = vld [vmem:[#allocation3 + $0x8] sm:$0xff]
    %v431 = vld [vmem:[#allocation3 + $0x10] sm:$0xff]
    %v432 = vld [vmem:[#allocation3 + $0x18] sm:$0xff]
    %v433 = vld [vmem:[#allocation3 + $0x20] sm:$0xff]
    %v434 = vld [vmem:[#allocation3 + $0x28] sm:$0xff]
    %v435 = vld [vmem:[#allocation3 + $0x30] sm:$0xff]
    %v436 = vld [vmem:[#allocation3 + $0x38] sm:$0xff]
    %v437 = vld [vmem:[#allocation3 + $0x40] sm:$0xff]
    %v438 = vld [vmem:[#allocation3 + $0x48] sm:$0xff]
    %v439 = vld [vmem:[#allocation3 + $0x50] sm:$0xff]
    %v440 = vld [vmem:[#allocation3 + $0x58] sm:$0xff]
    %v441 = vld [vmem:[#allocation3 + $0x60] sm:$0xff]
    %v442 = vld [vmem:[#allocation3 + $0x68] sm:$0xff]
    %v443 = vld [vmem:[#allocation3 + $0x70] sm:$0xff]
    %v444 = vld [vmem:[#allocation3 + $0x78] sm:$0xff]
    %v445 = vld [vmem:[#allocation3 + $0x80] sm:$0xff]
    %v446 = vld [vmem:[#allocation3 + $0x88] sm:$0xff]
    %v447 = vld [vmem:[#allocation3 + $0x90] sm:$0xff]
    %v448 = vld [vmem:[#allocation3 + $0x98] sm:$0xff]
    %v449 = vld [vmem:[#allocation3 + $0xa0] sm:$0xff]
    %v450 = vld [vmem:[#allocation3 + $0xa8] sm:$0xff]
    %v451 = vld [vmem:[#allocation3 + $0xb0] sm:$0xff]
    %v452 = vld [vmem:[#allocation3 + $0xb8] sm:$0xff]
    %v453 = vld [vmem:[#allocation3 + $0xc0] sm:$0xff]
    %v454 = vld [vmem:[#allocation3 + $0xc8] sm:$0xff]
    %v455 = vld [vmem:[#allocation3 + $0xd0] sm:$0xff]
    %v456 = vld [vmem:[#allocation3 + $0xd8] sm:$0xff]
    %v457 = vld [vmem:[#allocation3 + $0xe0] sm:$0xff]
    %v458 = vld [vmem:[#allocation3 + $0xe8] sm:$0xff]
    %v459 = vld [vmem:[#allocation3 + $0xf0] sm:$0xff]
    %v460 = vld [vmem:[#allocation3 + $0xf8] sm:$0xff]
    %v461 = vld [vmem:[#allocation3 + $0x100] sm:$0xff]
    %v462 = vld [vmem:[#allocation3 + $0x108] sm:$0xff]
    %v463 = vld [vmem:[#allocation3 + $0x110] sm:$0xff]
    %v464 = vld [vmem:[#allocation3 + $0x118] sm:$0xff]
    %v465 = vld [vmem:[#allocation3 + $0x120] sm:$0xff]
    %v466 = vld [vmem:[#allocation3 + $0x128] sm:$0xff]
    %v467 = vld [vmem:[#allocation3 + $0x130] sm:$0xff]
    %v468 = vld [vmem:[#allocation3 + $0x138] sm:$0xff]
    %v469 = vld [vmem:[#allocation3 + $0x140] sm:$0xff]
    %v470 = vld [vmem:[#allocation3 + $0x148] sm:$0xff]
    %v471 = vld [vmem:[#allocation3 + $0x150] sm:$0xff]
    %v472 = vld [vmem:[#allocation3 + $0x158] sm:$0xff]
    %v473 = vld [vmem:[#allocation3 + $0x160] sm:$0xff]
    %v474 = vld [vmem:[#allocation3 + $0x168] sm:$0xff]
    %v475 = vld [vmem:[#allocation3 + $0x170] sm:$0xff]
    %v476 = vld [vmem:[#allocation3 + $0x178] sm:$0xff]
    %v477 = vld [vmem:[#allocation3 + $0x180] sm:$0xff]
    %v478 = vld [vmem:[#allocation3 + $0x188] sm:$0xff]
    %v479 = vld [vmem:[#allocation3 + $0x190] sm:$0xff]
    %v480 = vld [vmem:[#allocation3 + $0x198] sm:$0xff]
    %v481 = vld [vmem:[#allocation3 + $0x1a0] sm:$0xff]
    %v482 = vld [vmem:[#allocation3 + $0x1a8] sm:$0xff]
    %v483 = vld [vmem:[#allocation3 + $0x1b0] sm:$0xff]
    %v484 = vld [vmem:[#allocation3 + $0x1b8] sm:$0xff]
    %v485 = vld [vmem:[#allocation3 + $0x1c0] sm:$0xff]
    %v486 = vld [vmem:[#allocation3 + $0x1c8] sm:$0xff]
    %v487 = vld [vmem:[#allocation3 + $0x1d0] sm:$0xff]
    %v488 = vld [vmem:[#allocation3 + $0x1d8] sm:$0xff]
    %v489 = vld [vmem:[#allocation3 + $0x1e0] sm:$0xff]
    %v490 = vld [vmem:[#allocation3 + $0x1e8] sm:$0xff]
    %v491 = vld [vmem:[#allocation3 + $0x1f0] sm:$0xff]
    %v492 = vld [vmem:[#allocation3 + $0x1f8] sm:$0xff]
    %v493 = vld [vmem:[#allocation3 + $0x200] sm:$0xff]
    %v494 = vld [vmem:[#allocation3 + $0x208] sm:$0xff]
    %v495 = vld [vmem:[#allocation3 + $0x210] sm:$0xff]
    %v496 = vld [vmem:[#allocation3 + $0x218] sm:$0xff]
    %v497 = vld [vmem:[#allocation3 + $0x220] sm:$0xff]
    %v498 = vld [vmem:[#allocation3 + $0x228] sm:$0xff]
    %v499 = vld [vmem:[#allocation3 + $0x230] sm:$0xff]
    %v500 = vld [vmem:[#allocation3 + $0x238] sm:$0xff]
    %v501 = vld [vmem:[#allocation3 + $0x240] sm:$0xff]
    %v502 = vld [vmem:[#allocation3 + $0x248] sm:$0xff]
    %v503 = vld [vmem:[#allocation3 + $0x250] sm:$0xff]
    %v504 = vld [vmem:[#allocation3 + $0x258] sm:$0xff]
    %v505 = vld [vmem:[#allocation3 + $0x260] sm:$0xff]
    %v506 = vld [vmem:[#allocation3 + $0x268] sm:$0xff]
    %v507 = vld [vmem:[#allocation3 + $0x270] sm:$0xff]
    %v508 = vld [vmem:[#allocation3 + $0x278] sm:$0xff]
    %v509 = vld [vmem:[#allocation3 + $0x280] sm:$0xff]
    %v510 = vld [vmem:[#allocation3 + $0x288] sm:$0xff]
    %v511 = vld [vmem:[#allocation3 + $0x290] sm:$0xff]
    %v512 = vld [vmem:[#allocation3 + $0x298] sm:$0xff]
    %v513 = vld [vmem:[#allocation3 + $0x2a0] sm:$0xff]
    %v514 = vld [vmem:[#allocation3 + $0x2a8] sm:$0xff]
    %v515 = vld [vmem:[#allocation3 + $0x2b0] sm:$0xff]
    %v516 = vld [vmem:[#allocation3 + $0x2b8] sm:$0xff]
    %v517 = vld [vmem:[#allocation3 + $0x2c0] sm:$0xff]
    %v518 = vld [vmem:[#allocation3 + $0x2c8] sm:$0xff]
    %v519 = vld [vmem:[#allocation3 + $0x2d0] sm:$0xff]
    %v520 = vld [vmem:[#allocation3 + $0x2d8] sm:$0xff]
    %v521 = vld [vmem:[#allocation3 + $0x2e0] sm:$0xff]
    %v522 = vld [vmem:[#allocation3 + $0x2e8] sm:$0xff]
    %v523 = vld [vmem:[#allocation3 + $0x2f0] sm:$0xff]
    %v524 = vld [vmem:[#allocation3 + $0x2f8] sm:$0xff]
    %v525 = vld [vmem:[#allocation3 + $0x300] sm:$0xff]
    %v526 = vld [vmem:[#allocation3 + $0x308] sm:$0xff]
    %v527 = vld [vmem:[#allocation3 + $0x310] sm:$0xff]
    %v528 = vld [vmem:[#allocation3 + $0x318] sm:$0xff]
    %v529 = vld [vmem:[#allocation3 + $0x320] sm:$0xff]
    %v530 = vld [vmem:[#allocation3 + $0x328] sm:$0xff]
    %v531 = vld [vmem:[#allocation3 + $0x330] sm:$0xff]
    %v532 = vld [vmem:[#allocation3 + $0x338] sm:$0xff]
    %v533 = vld [vmem:[#allocation3 + $0x340] sm:$0xff]
    %v534 = vld [vmem:[#allocation3 + $0x348] sm:$0xff]
    %v535 = vld [vmem:[#allocation3 + $0x350] sm:$0xff]
    %v536 = vld [vmem:[#allocation3 + $0x358] sm:$0xff]
    %v537 = vld [vmem:[#allocation3 + $0x360] sm:$0xff]
    %v538 = vld [vmem:[#allocation3 + $0x368] sm:$0xff]
    %v539 = vld [vmem:[#allocation3 + $0x370] sm:$0xff]
    %v540 = vld [vmem:[#allocation3 + $0x378] sm:$0xff]
    %v541 = vld [vmem:[#allocation3 + $0x380] sm:$0xff]
    %v542 = vld [vmem:[#allocation3 + $0x388] sm:$0xff]
    %v543 = vld [vmem:[#allocation3 + $0x390] sm:$0xff]
    %v544 = vld [vmem:[#allocation3 + $0x398] sm:$0xff]
    %v545 = vld [vmem:[#allocation3 + $0x3a0] sm:$0xff]
    %v546 = vld [vmem:[#allocation3 + $0x3a8] sm:$0xff]
    %v547 = vld [vmem:[#allocation3 + $0x3b0] sm:$0xff]
    %v548 = vld [vmem:[#allocation3 + $0x3b8] sm:$0xff]
    %v549 = vld [vmem:[#allocation3 + $0x3c0] sm:$0xff]
    %v550 = vld [vmem:[#allocation3 + $0x3c8] sm:$0xff]
    %v551 = vld [vmem:[#allocation3 + $0x3d0] sm:$0xff]
    %v552 = vld [vmem:[#allocation3 + $0x3d8] sm:$0xff]
    %v553 = vld [vmem:[#allocation3 + $0x3e0] sm:$0xff]
    %v554 = vld [vmem:[#allocation3 + $0x3e8] sm:$0xff]
    %v555 = vld [vmem:[#allocation3 + $0x3f0] sm:$0xff]
    %v556 = vld [vmem:[#allocation3 + $0x3f8] sm:$0xff]
    %v557 = vld [vmem:[#allocation3 + $0x400] sm:$0xff]
    %v558 = vld [vmem:[#allocation3 + $0x408] sm:$0xff]
    %v559 = vld [vmem:[#allocation3 + $0x410] sm:$0xff]
    %v560 = vld [vmem:[#allocation3 + $0x418] sm:$0xff]
    %v561 = vld [vmem:[#allocation3 + $0x420] sm:$0xff]
    %v562 = vld [vmem:[#allocation3 + $0x428] sm:$0xff]
    %v563 = vld [vmem:[#allocation3 + $0x430] sm:$0xff]
    %v564 = vld [vmem:[#allocation3 + $0x438] sm:$0xff]
    %v565 = vld [vmem:[#allocation3 + $0x440] sm:$0xff]
    %v566 = vld [vmem:[#allocation3 + $0x448] sm:$0xff]
    %v567 = vld [vmem:[#allocation3 + $0x450] sm:$0xff]
    %v568 = vld [vmem:[#allocation3 + $0x458] sm:$0xff]
    %v569 = vld [vmem:[#allocation3 + $0x460] sm:$0xff]
    %v570 = vld [vmem:[#allocation3 + $0x468] sm:$0xff]
    %v571 = vld [vmem:[#allocation3 + $0x470] sm:$0xff]
    %v572 = vld [vmem:[#allocation3 + $0x478] sm:$0xff]
    %v573 = vld [vmem:[#allocation3 + $0x480] sm:$0xff]
    %v574 = vld [vmem:[#allocation3 + $0x488] sm:$0xff]
    %v575 = vld [vmem:[#allocation3 + $0x490] sm:$0xff]
    %v576 = vld [vmem:[#allocation3 + $0x498] sm:$0xff]
    %v577 = vld [vmem:[#allocation3 + $0x4a0] sm:$0xff]
    %v578 = vld [vmem:[#allocation3 + $0x4a8] sm:$0xff]
    %v579 = vld [vmem:[#allocation3 + $0x4b0] sm:$0xff]
    %v580 = vld [vmem:[#allocation3 + $0x4b8] sm:$0xff]
    %v581 = vld [vmem:[#allocation3 + $0x4c0] sm:$0xff]
    %v582 = vld [vmem:[#allocation3 + $0x4c8] sm:$0xff]
    %v583 = vld [vmem:[#allocation3 + $0x4d0] sm:$0xff]
    %v584 = vld [vmem:[#allocation3 + $0x4d8] sm:$0xff]
    %v585 = vld [vmem:[#allocation3 + $0x4e0] sm:$0xff]
    %v586 = vld [vmem:[#allocation3 + $0x4e8] sm:$0xff]
    %v587 = vld [vmem:[#allocation3 + $0x4f0] sm:$0xff]
    %v588 = vld [vmem:[#allocation3 + $0x4f8] sm:$0xff]
    %v589 = vld [vmem:[#allocation3 + $0x500] sm:$0xff]
    %v590 = vld [vmem:[#allocation3 + $0x508] sm:$0xff]
    %v591 = vld [vmem:[#allocation3 + $0x510] sm:$0xff]
    %v592 = vld [vmem:[#allocation3 + $0x518] sm:$0xff]
    %v593 = vld [vmem:[#allocation3 + $0x520] sm:$0xff]
    %v594 = vld [vmem:[#allocation3 + $0x528] sm:$0xff]
    %v595 = vld [vmem:[#allocation3 + $0x530] sm:$0xff]
    %v596 = vld [vmem:[#allocation3 + $0x538] sm:$0xff]
    %v597 = vld [vmem:[#allocation3 + $0x540] sm:$0xff]
    %v598 = vld [vmem:[#allocation3 + $0x548] sm:$0xff]
    %v599 = vld [vmem:[#allocation3 + $0x550] sm:$0xff]
    %v600 = vld [vmem:[#allocation3 + $0x558] sm:$0xff]
    %v601 = vld [vmem:[#allocation3 + $0x560] sm:$0xff]
    %v602 = vld [vmem:[#allocation3 + $0x568] sm:$0xff]
    %v603 = vld [vmem:[#allocation3 + $0x570] sm:$0xff]
    %v604 = vld [vmem:[#allocation3 + $0x578] sm:$0xff]
    %v605 = vld [vmem:[#allocation3 + $0x580] sm:$0xff]
    %v606 = vld [vmem:[#allocation3 + $0x588] sm:$0xff]
    %v607 = vld [vmem:[#allocation3 + $0x590] sm:$0xff]
    %v608 = vld [vmem:[#allocation3 + $0x598] sm:$0xff]
    %v609 = vld [vmem:[#allocation3 + $0x5a0] sm:$0xff]
    %v610 = vld [vmem:[#allocation3 + $0x5a8] sm:$0xff]
    %v611 = vld [vmem:[#allocation3 + $0x5b0] sm:$0xff]
    %v612 = vld [vmem:[#allocation3 + $0x5b8] sm:$0xff]
    %v613 = vld [vmem:[#allocation3 + $0x5c0] sm:$0xff]
    %v614 = vld [vmem:[#allocation3 + $0x5c8] sm:$0xff]
    %v615 = vld [vmem:[#allocation3 + $0x5d0] sm:$0xff]
    %v616 = vld [vmem:[#allocation3 + $0x5d8] sm:$0xff]
    %v617 = vld [vmem:[#allocation3 + $0x5e0] sm:$0xff]
    %v618 = vld [vmem:[#allocation3 + $0x5e8] sm:$0xff]
    %v619 = vld [vmem:[#allocation3 + $0x5f0] sm:$0xff]
    %v620 = vld [vmem:[#allocation3 + $0x5f8] sm:$0xff]
    %v621 = vld [vmem:[%s8] sm:$0xff]
    %v622 = vld [vmem:[%s8 + $0x8] sm:$0xff]
    %v623 = vld [vmem:[%s8 + $0x10] sm:$0xff]
    %v624 = vld [vmem:[%s8 + $0x18] sm:$0xff]
    %v625 = vld [vmem:[%s8 + $0x20] sm:$0xff]
    %v626 = vld [vmem:[%s8 + $0x28] sm:$0xff]
    %627 = vmatpush.msra.mxu0 %v519
    %628 = vmatpush.msra.mxu0 %v513
    %629 = vmatpush.msra.mxu0 %v507
    %630 = vmatpush.msra.mxu0 %v501
    %631 = vmatpush.msra.mxu0 %v495
    %632 = vmatpush.msra.mxu0 %v489
    %633 = vmatpush.msra.mxu0 %v483
    %634 = vmatpush.msra.mxu0 %v477
    %635 = vmatpush.msra.mxu0 %v471
    %636 = vmatpush.msra.mxu0 %v465
    %637 = vmatpush.msra.mxu0 %v459
    %638 = vmatpush.msra.mxu0 %v453
    %639 = vmatpush.msra.mxu0 %v447
    %640 = vmatpush.msra.mxu0 %v441
    %641 = vmatpush.msra.mxu0 %v435
    %642 = vmatpush.msra.mxu0 %v429
    %643 = vmatmul.f32.gmra.mxu0 %v425
    %v644 = vpop.f32.mrf.mxu0
    %v645 = vadd.f32 %v621, %v644
    %646 = vdwg.mxu0
    %647 = vmatpush.msra.mxu0 %v615
    %648 = vmatpush.msra.mxu0 %v609
    %649 = vmatpush.msra.mxu0 %v603
    %650 = vmatpush.msra.mxu0 %v597
    %651 = vmatpush.msra.mxu0 %v591
    %652 = vmatpush.msra.mxu0 %v585
    %653 = vmatpush.msra.mxu0 %v579
    %654 = vmatpush.msra.mxu0 %v573
    %655 = vmatpush.msra.mxu0 %v567
    %656 = vmatpush.msra.mxu0 %v561
    %657 = vmatpush.msra.mxu0 %v555
    %658 = vmatpush.msra.mxu0 %v549
    %659 = vmatpush.msra.mxu0 %v543
    %660 = vmatpush.msra.mxu0 %v537
    %661 = vmatpush.msra.mxu0 %v531
    %662 = vmatpush.msra.mxu0 %v525
    %663 = vmatmul.f32.gmra.mxu0 %v428
    %v664 = vpop.f32.mrf.mxu0
    %v665 = vadd.f32 %v645, %v664
    %666 = vdwg.mxu0
    %667 = vmatpush.msra.mxu0 %v520
    %668 = vmatpush.msra.mxu0 %v514
    %669 = vmatpush.msra.mxu0 %v508
    %670 = vmatpush.msra.mxu0 %v502
    %671 = vmatpush.msra.mxu0 %v496
    %672 = vmatpush.msra.mxu0 %v490
    %673 = vmatpush.msra.mxu0 %v484
    %674 = vmatpush.msra.mxu0 %v478
    %675 = vmatpush.msra.mxu0 %v472
    %676 = vmatpush.msra.mxu0 %v466
    %677 = vmatpush.msra.mxu0 %v460
    %678 = vmatpush.msra.mxu0 %v454
    %679 = vmatpush.msra.mxu0 %v448
    %680 = vmatpush.msra.mxu0 %v442
    %681 = vmatpush.msra.mxu0 %v436
    %682 = vmatpush.msra.mxu0 %v430
    %683 = vmatmul.f32.gmra.mxu0 %v425
    %v684 = vpop.f32.mrf.mxu0
    %v685 = vadd.f32 %v622, %v684
    %686 = vdwg.mxu0
    %687 = vmatpush.msra.mxu0 %v616
    %688 = vmatpush.msra.mxu0 %v610
    %689 = vmatpush.msra.mxu0 %v604
    %690 = vmatpush.msra.mxu0 %v598
    %691 = vmatpush.msra.mxu0 %v592
    %692 = vmatpush.msra.mxu0 %v586
    %693 = vmatpush.msra.mxu0 %v580
    %694 = vmatpush.msra.mxu0 %v574
    %695 = vmatpush.msra.mxu0 %v568
    %696 = vmatpush.msra.mxu0 %v562
    %697 = vmatpush.msra.mxu0 %v556
    %698 = vmatpush.msra.mxu0 %v550
    %699 = vmatpush.msra.mxu0 %v544
    %700 = vmatpush.msra.mxu0 %v538
    %701 = vmatpush.msra.mxu0 %v532
    %702 = vmatpush.msra.mxu0 %v526
    %703 = vmatmul.f32.gmra.mxu0 %v428
    %v704 = vpop.f32.mrf.mxu0
    %v705 = vadd.f32 %v685, %v704
    %706 = vdwg.mxu0
    %707 = vmatpush.msra.mxu0 %v521
    %708 = vmatpush.msra.mxu0 %v515
    %709 = vmatpush.msra.mxu0 %v509
    %710 = vmatpush.msra.mxu0 %v503
    %711 = vmatpush.msra.mxu0 %v497
    %712 = vmatpush.msra.mxu0 %v491
    %713 = vmatpush.msra.mxu0 %v485
    %714 = vmatpush.msra.mxu0 %v479
    %715 = vmatpush.msra.mxu0 %v473
    %716 = vmatpush.msra.mxu0 %v467
    %717 = vmatpush.msra.mxu0 %v461
    %718 = vmatpush.msra.mxu0 %v455
    %719 = vmatpush.msra.mxu0 %v449
    %720 = vmatpush.msra.mxu0 %v443
    %721 = vmatpush.msra.mxu0 %v437
    %722 = vmatpush.msra.mxu0 %v431
    %723 = vmatmul.f32.gmra.mxu0 %v425
    %v724 = vpop.f32.mrf.mxu0
    %v725 = vadd.f32 %v623, %v724
    %726 = vdwg.mxu0
    %727 = vmatpush.msra.mxu0 %v617
    %728 = vmatpush.msra.mxu0 %v611
    %729 = vmatpush.msra.mxu0 %v605
    %730 = vmatpush.msra.mxu0 %v599
    %731 = vmatpush.msra.mxu0 %v593
    %732 = vmatpush.msra.mxu0 %v587
    %733 = vmatpush.msra.mxu0 %v581
    %734 = vmatpush.msra.mxu0 %v575
    %735 = vmatpush.msra.mxu0 %v569
    %736 = vmatpush.msra.mxu0 %v563
    %737 = vmatpush.msra.mxu0 %v557
    %738 = vmatpush.msra.mxu0 %v551
    %739 = vmatpush.msra.mxu0 %v545
    %740 = vmatpush.msra.mxu0 %v539
    %741 = vmatpush.msra.mxu0 %v533
    %742 = vmatpush.msra.mxu0 %v527
    %743 = vmatmul.f32.gmra.mxu0 %v428
    %v744 = vpop.f32.mrf.mxu0
    %v745 = vadd.f32 %v725, %v744
    %746 = vdwg.mxu0
    %747 = vmatpush.msra.mxu0 %v522
    %748 = vmatpush.msra.mxu0 %v516
    %749 = vmatpush.msra.mxu0 %v510
    %750 = vmatpush.msra.mxu0 %v504
    %751 = vmatpush.msra.mxu0 %v498
    %752 = vmatpush.msra.mxu0 %v492
    %753 = vmatpush.msra.mxu0 %v486
    %754 = vmatpush.msra.mxu0 %v480
    %755 = vmatpush.msra.mxu0 %v474
    %756 = vmatpush.msra.mxu0 %v468
    %757 = vmatpush.msra.mxu0 %v462
    %758 = vmatpush.msra.mxu0 %v456
    %759 = vmatpush.msra.mxu0 %v450
    %760 = vmatpush.msra.mxu0 %v444
    %761 = vmatpush.msra.mxu0 %v438
    %762 = vmatpush.msra.mxu0 %v432
    %763 = vmatmul.f32.gmra.mxu0 %v425
    %v764 = vpop.f32.mrf.mxu0
    %v765 = vadd.f32 %v624, %v764
    %766 = vdwg.mxu0
    %767 = vmatpush.msra.mxu0 %v618
    %768 = vmatpush.msra.mxu0 %v612
    %769 = vmatpush.msra.mxu0 %v606
    %770 = vmatpush.msra.mxu0 %v600
    %771 = vmatpush.msra.mxu0 %v594
    %772 = vmatpush.msra.mxu0 %v588
    %773 = vmatpush.msra.mxu0 %v582
    %774 = vmatpush.msra.mxu0 %v576
    %775 = vmatpush.msra.mxu0 %v570
    %776 = vmatpush.msra.mxu0 %v564
    %777 = vmatpush.msra.mxu0 %v558
    %778 = vmatpush.msra.mxu0 %v552
    %779 = vmatpush.msra.mxu0 %v546
    %780 = vmatpush.msra.mxu0 %v540
    %781 = vmatpush.msra.mxu0 %v534
    %782 = vmatpush.msra.mxu0 %v528
    %783 = vmatmul.f32.gmra.mxu0 %v428
    %v784 = vpop.f32.mrf.mxu0
    %v785 = vadd.f32 %v765, %v784
    %786 = vdwg.mxu0
    %787 = vmatpush.msra.mxu0 %v523
    %788 = vmatpush.msra.mxu0 %v517
    %789 = vmatpush.msra.mxu0 %v511
    %790 = vmatpush.msra.mxu0 %v505
    %791 = vmatpush.msra.mxu0 %v499
    %792 = vmatpush.msra.mxu0 %v493
    %793 = vmatpush.msra.mxu0 %v487
    %794 = vmatpush.msra.mxu0 %v481
    %795 = vmatpush.msra.mxu0 %v475
    %796 = vmatpush.msra.mxu0 %v469
    %797 = vmatpush.msra.mxu0 %v463
    %798 = vmatpush.msra.mxu0 %v457
    %799 = vmatpush.msra.mxu0 %v451
    %800 = vmatpush.msra.mxu0 %v445
    %801 = vmatpush.msra.mxu0 %v439
    %802 = vmatpush.msra.mxu0 %v433
    %803 = vmatmul.f32.gmra.mxu0 %v425
    %v804 = vpop.f32.mrf.mxu0
    %v805 = vadd.f32 %v625, %v804
    %806 = vdwg.mxu0
    %807 = vmatpush.msra.mxu0 %v619
    %808 = vmatpush.msra.mxu0 %v613
    %809 = vmatpush.msra.mxu0 %v607
    %810 = vmatpush.msra.mxu0 %v601
    %811 = vmatpush.msra.mxu0 %v595
    %812 = vmatpush.msra.mxu0 %v589
    %813 = vmatpush.msra.mxu0 %v583
    %814 = vmatpush.msra.mxu0 %v577
    %815 = vmatpush.msra.mxu0 %v571
    %816 = vmatpush.msra.mxu0 %v565
    %817 = vmatpush.msra.mxu0 %v559
    %818 = vmatpush.msra.mxu0 %v553
    %819 = vmatpush.msra.mxu0 %v547
    %820 = vmatpush.msra.mxu0 %v541
    %821 = vmatpush.msra.mxu0 %v535
    %822 = vmatpush.msra.mxu0 %v529
    %823 = vmatmul.f32.gmra.mxu0 %v428
    %v824 = vpop.f32.mrf.mxu0
    %v825 = vadd.f32 %v805, %v824
    %826 = vdwg.mxu0
    %827 = vmatpush.msra.mxu0 %v524
    %828 = vmatpush.msra.mxu0 %v518
    %829 = vmatpush.msra.mxu0 %v512
    %830 = vmatpush.msra.mxu0 %v506
    %831 = vmatpush.msra.mxu0 %v500
    %832 = vmatpush.msra.mxu0 %v494
    %833 = vmatpush.msra.mxu0 %v488
    %834 = vmatpush.msra.mxu0 %v482
    %835 = vmatpush.msra.mxu0 %v476
    %836 = vmatpush.msra.mxu0 %v470
    %837 = vmatpush.msra.mxu0 %v464
    %838 = vmatpush.msra.mxu0 %v458
    %839 = vmatpush.msra.mxu0 %v452
    %840 = vmatpush.msra.mxu0 %v446
    %841 = vmatpush.msra.mxu0 %v440
    %842 = vmatpush.msra.mxu0 %v434
    %843 = vmatmul.f32.gmra.mxu0 %v425
    %v844 = vpop.f32.mrf.mxu0
    %v845 = vadd.f32 %v626, %v844
    %846 = vdwg.mxu0
    %847 = vmatpush.msra.mxu0 %v620
    %848 = vmatpush.msra.mxu0 %v614
    %849 = vmatpush.msra.mxu0 %v608
    %850 = vmatpush.msra.mxu0 %v602
    %851 = vmatpush.msra.mxu0 %v596
    %852 = vmatpush.msra.mxu0 %v590
    %853 = vmatpush.msra.mxu0 %v584
    %854 = vmatpush.msra.mxu0 %v578
    %855 = vmatpush.msra.mxu0 %v572
    %856 = vmatpush.msra.mxu0 %v566
    %857 = vmatpush.msra.mxu0 %v560
    %858 = vmatpush.msra.mxu0 %v554
    %859 = vmatpush.msra.mxu0 %v548
    %860 = vmatpush.msra.mxu0 %v542
    %861 = vmatpush.msra.mxu0 %v536
    %862 = vmatpush.msra.mxu0 %v530
    %863 = vmatmul.f32.gmra.mxu0 %v428
    %v864 = vpop.f32.mrf.mxu0
    %v865 = vadd.f32 %v845, %v864
    %866 = vdwg.mxu0
    %868 = vrot.lane.b32.xlu0 %v665, 96
    %v869 = vpop.permute.xlu0 %868
    %vm870 = vcmask 130048
    %v871 = vsel %vm870, %v665, 0
    %v873 = vsel %vm870, %v869, 0
    %875 = vmatpush.xpose.msra.mxu0 0.0
    %876 = vmatpush.xpose.msra.mxu0 0.0
    %877 = vmatpush.xpose.msra.mxu0 0.0
    %878 = vmatpush.xpose.msra.mxu0 0.0
    %879 = vmatpush.xpose.msra.mxu0 0.0
    %880 = vmatpush.xpose.msra.mxu0 0.0
    %881 = vmatpush.xpose.msra.mxu0 0.0
    %882 = vmatpush.xpose.msra.mxu0 0.0
    %883 = vmatpush.xpose.msra.mxu0 0.0
    %884 = vmatpush.xpose.msra.mxu0 0.0
    %885 = vmatpush.xpose.msra.mxu0 0.0
    %886 = vmatpush.xpose.msra.mxu0 0.0
    %887 = vmatpush.xpose.msra.mxu0 0.0
    %888 = vmatpush.xpose.msra.mxu0 0.0
    %889 = vmatpush.xpose.msra.mxu0 0.0
    %890 = vmatpush.xpose.msra.mxu0 %v873
    %891 = vmatmul.f32.gmra.mxu0 %v871
    %v892 = vpop.f32.mrf.mxu0
    %v893 = vadd.f32 0.0, %v892
    %894 = vdwg.mxu0
    %v895 = vmul.f32 %v893, 0.25
    %vm896 = vcmask 64512
    %v897 = vsel %vm896, %v895, -inf
    %898 = vmax.xlane.f32.xlu0 %v897
    %v899 = vpop.xlane.xlu0 %898
    %v900 = vsub.f32 %v895, %v899
    %v901 = vmul.f32 %v900, 1.442695
    %v902 = vpow.pop %v901
    %v903 = vsel %vm896, %v902, 0.0
    %904 = vadd.xlane.f32.xlu0 %v903
    %v905 = vpop.xlane.xlu0 %904
    %v906 = vrcp.pop %v905
    %v907 = vmul.f32 %v902, %v906
    %908 = vrot.lane.b32.xlu0 %v665, 64
    %v909 = vpop.permute.xlu0 %908
    %v912 = vsel %vm896, %v907, 0
    %914 = vmatpush.msra.mxu0 0.0
    %915 = vmatpush.msra.mxu0 0.0
    %916 = vmatpush.msra.mxu0 0.0
    %917 = vmatpush.msra.mxu0 0.0
    %918 = vmatpush.msra.mxu0 0.0
    %919 = vmatpush.msra.mxu0 0.0
    %920 = vmatpush.msra.mxu0 0.0
    %921 = vmatpush.msra.mxu0 0.0
    %922 = vmatpush.msra.mxu0 0.0
    %923 = vmatpush.msra.mxu0 0.0
    %924 = vmatpush.msra.mxu0 0.0
    %925 = vmatpush.msra.mxu0 0.0
    %926 = vmatpush.msra.mxu0 0.0
    %927 = vmatpush.msra.mxu0 0.0
    %928 = vmatpush.msra.mxu0 0.0
    %929 = vmatpush.msra.mxu0 %v909
    %930 = vmatmul.f32.gmra.mxu0 %v912
    %v931 = vpop.f32.mrf.mxu0
    %v932 = vadd.f32 0.0, %v931
    %933 = vdwg.mxu0
    %934 = vrot.lane.b32.xlu0 %v665, 112
    %v935 = vpop.permute.xlu0 %934
    %936 = vrot.lane.b32.xlu0 %v665, 80
    %v937 = vpop.permute.xlu0 %936
    %v938 = vsel %vm870, %v935, 0
    %v940 = vsel %vm870, %v937, 0
    %942 = vmatpush.xpose.msra.mxu0 0.0
    %943 = vmatpush.xpose.msra.mxu0 0.0
    %944 = vmatpush.xpose.msra.mxu0 0.0
    %945 = vmatpush.xpose.msra.mxu0 0.0
    %946 = vmatpush.xpose.msra.mxu0 0.0
    %947 = vmatpush.xpose.msra.mxu0 0.0
    %948 = vmatpush.xpose.msra.mxu0 0.0
    %949 = vmatpush.xpose.msra.mxu0 0.0
    %950 = vmatpush.xpose.msra.mxu0 0.0
    %951 = vmatpush.xpose.msra.mxu0 0.0
    %952 = vmatpush.xpose.msra.mxu0 0.0
    %953 = vmatpush.xpose.msra.mxu0 0.0
    %954 = vmatpush.xpose.msra.mxu0 0.0
    %955 = vmatpush.xpose.msra.mxu0 0.0
    %956 = vmatpush.xpose.msra.mxu0 0.0
    %957 = vmatpush.xpose.msra.mxu0 %v940
    %958 = vmatmul.f32.gmra.mxu0 %v938
    %v959 = vpop.f32.mrf.mxu0
    %v960 = vadd.f32 0.0, %v959
    %961 = vdwg.mxu0
    %v962 = vmul.f32 %v960, 0.25
    %v963 = vsel %vm896, %v962, -inf
    %964 = vmax.xlane.f32.xlu0 %v963
    %v965 = vpop.xlane.xlu0 %964
    %v966 = vsub.f32 %v962, %v965
    %v967 = vmul.f32 %v966, 1.442695
    %v968 = vpow.pop %v967
    %v969 = vsel %vm896, %v968, 0.0
    %970 = vadd.xlane.f32.xlu0 %v969
    %v971 = vpop.xlane.xlu0 %970
    %v972 = vrcp.pop %v971
    %v973 = vmul.f32 %v968, %v972
    %974 = vrot.lane.b32.xlu0 %v665, 48
    %v975 = vpop.permute.xlu0 %974
    %v978 = vsel %vm896, %v973, 0
    %980 = vmatpush.msra.mxu0 0.0
    %981 = vmatpush.msra.mxu0 0.0
    %982 = vmatpush.msra.mxu0 0.0
    %983 = vmatpush.msra.mxu0 0.0
    %984 = vmatpush.msra.mxu0 0.0
    %985 = vmatpush.msra.mxu0 0.0
    %986 = vmatpush.msra.mxu0 0.0
    %987 = vmatpush.msra.mxu0 0.0
    %988 = vmatpush.msra.mxu0 0.0
    %989 = vmatpush.msra.mxu0 0.0
    %990 = vmatpush.msra.mxu0 0.0
    %991 = vmatpush.msra.mxu0 0.0
    %992 = vmatpush.msra.mxu0 0.0
    %993 = vmatpush.msra.mxu0 0.0
    %994 = vmatpush.msra.mxu0 0.0
    %995 = vmatpush.msra.mxu0 %v975
    %996 = vmatmul.f32.gmra.mxu0 %v978
    %v997 = vpop.f32.mrf.mxu0
    %v998 = vadd.f32 0.0, %v997
    %999 = vdwg.mxu0
    %1000 = vrot.lane.b32.xlu0 %v665, 32
    %v1001 = vpop.permute.xlu0 %1000
    %v1002 = vsel %vm870, %v1001, 0
    %v1005 = vsel %vm870, %v705, 0
    %1007 = vmatpush.xpose.msra.mxu0 0.0
    %1008 = vmatpush.xpose.msra.mxu0 0.0
    %1009 = vmatpush.xpose.msra.mxu0 0.0
    %1010 = vmatpush.xpose.msra.mxu0 0.0
    %1011 = vmatpush.xpose.msra.mxu0 0.0
    %1012 = vmatpush.xpose.msra.mxu0 0.0
    %1013 = vmatpush.xpose.msra.mxu0 0.0
    %1014 = vmatpush.xpose.msra.mxu0 0.0
    %1015 = vmatpush.xpose.msra.mxu0 0.0
    %1016 = vmatpush.xpose.msra.mxu0 0.0
    %1017 = vmatpush.xpose.msra.mxu0 0.0
    %1018 = vmatpush.xpose.msra.mxu0 0.0
    %1019 = vmatpush.xpose.msra.mxu0 0.0
    %1020 = vmatpush.xpose.msra.mxu0 0.0
    %1021 = vmatpush.xpose.msra.mxu0 0.0
    %1022 = vmatpush.xpose.msra.mxu0 %v1005
    %1023 = vmatmul.f32.gmra.mxu0 %v1002
    %v1024 = vpop.f32.mrf.mxu0
    %v1025 = vadd.f32 0.0, %v1024
    %1026 = vdwg.mxu0
    %v1027 = vmul.f32 %v1025, 0.25
    %v1028 = vsel %vm896, %v1027, -inf
    %1029 = vmax.xlane.f32.xlu0 %v1028
    %v1030 = vpop.xlane.xlu0 %1029
    %v1031 = vsub.f32 %v1027, %v1030
    %v1032 = vmul.f32 %v1031, 1.442695
    %v1033 = vpow.pop %v1032
    %v1034 = vsel %vm896, %v1033, 0.0
    %1035 = vadd.xlane.f32.xlu0 %v1034
    %v1036 = vpop.xlane.xlu0 %1035
    %v1037 = vrcp.pop %v1036
    %v1038 = vmul.f32 %v1033, %v1037
    %1039 = vrot.lane.b32.xlu0 %v705, 96
    %v1040 = vpop.permute.xlu0 %1039
    %v1043 = vsel %vm896, %v1038, 0
    %1045 = vmatpush.msra.mxu0 0.0
    %1046 = vmatpush.msra.mxu0 0.0
    %1047 = vmatpush.msra.mxu0 0.0
    %1048 = vmatpush.msra.mxu0 0.0
    %1049 = vmatpush.msra.mxu0 0.0
    %1050 = vmatpush.msra.mxu0 0.0
    %1051 = vmatpush.msra.mxu0 0.0
    %1052 = vmatpush.msra.mxu0 0.0
    %1053 = vmatpush.msra.mxu0 0.0
    %1054 = vmatpush.msra.mxu0 0.0
    %1055 = vmatpush.msra.mxu0 0.0
    %1056 = vmatpush.msra.mxu0 0.0
    %1057 = vmatpush.msra.mxu0 0.0
    %1058 = vmatpush.msra.mxu0 0.0
    %1059 = vmatpush.msra.mxu0 0.0
    %1060 = vmatpush.msra.mxu0 %v1040
    %1061 = vmatmul.f32.gmra.mxu0 %v1043
    %v1062 = vpop.f32.mrf.mxu0
    %v1063 = vadd.f32 0.0, %v1062
    %1064 = vdwg.mxu0
    %1065 = vrot.lane.b32.xlu0 %v665, 16
    %v1066 = vpop.permute.xlu0 %1065
    %1067 = vrot.lane.b32.xlu0 %v705, 112
    %v1068 = vpop.permute.xlu0 %1067
    %v1069 = vsel %vm870, %v1066, 0
    %v1071 = vsel %vm870, %v1068, 0
    %1073 = vmatpush.xpose.msra.mxu0 0.0
    %1074 = vmatpush.xpose.msra.mxu0 0.0
    %1075 = vmatpush.xpose.msra.mxu0 0.0
    %1076 = vmatpush.xpose.msra.mxu0 0.0
    %1077 = vmatpush.xpose.msra.mxu0 0.0
    %1078 = vmatpush.xpose.msra.mxu0 0.0
    %1079 = vmatpush.xpose.msra.mxu0 0.0
    %1080 = vmatpush.xpose.msra.mxu0 0.0
    %1081 = vmatpush.xpose.msra.mxu0 0.0
    %1082 = vmatpush.xpose.msra.mxu0 0.0
    %1083 = vmatpush.xpose.msra.mxu0 0.0
    %1084 = vmatpush.xpose.msra.mxu0 0.0
    %1085 = vmatpush.xpose.msra.mxu0 0.0
    %1086 = vmatpush.xpose.msra.mxu0 0.0
    %1087 = vmatpush.xpose.msra.mxu0 0.0
    %1088 = vmatpush.xpose.msra.mxu0 %v1071
    %1089 = vmatmul.f32.gmra.mxu0 %v1069
    %v1090 = vpop.f32.mrf.mxu0
    %v1091 = vadd.f32 0.0, %v1090
    %1092 = vdwg.mxu0
    %v1093 = vmul.f32 %v1091, 0.25
    %v1094 = vsel %vm896, %v1093, -inf
    %1095 = vmax.xlane.f32.xlu0 %v1094
    %v1096 = vpop.xlane.xlu0 %1095
    %v1097 = vsub.f32 %v1093, %v1096
    %v1098 = vmul.f32 %v1097, 1.442695
    %v1099 = vpow.pop %v1098
    %v1100 = vsel %vm896, %v1099, 0.0
    %1101 = vadd.xlane.f32.xlu0 %v1100
    %v1102 = vpop.xlane.xlu0 %1101
    %v1103 = vrcp.pop %v1102
    %v1104 = vmul.f32 %v1099, %v1103
    %1105 = vrot.lane.b32.xlu0 %v705, 80
    %v1106 = vpop.permute.xlu0 %1105
    %v1109 = vsel %vm896, %v1104, 0
    %1111 = vmatpush.msra.mxu0 0.0
    %1112 = vmatpush.msra.mxu0 0.0
    %1113 = vmatpush.msra.mxu0 0.0
    %1114 = vmatpush.msra.mxu0 0.0
    %1115 = vmatpush.msra.mxu0 0.0
    %1116 = vmatpush.msra.mxu0 0.0
    %1117 = vmatpush.msra.mxu0 0.0
    %1118 = vmatpush.msra.mxu0 0.0
    %1119 = vmatpush.msra.mxu0 0.0
    %1120 = vmatpush.msra.mxu0 0.0
    %1121 = vmatpush.msra.mxu0 0.0
    %1122 = vmatpush.msra.mxu0 0.0
    %1123 = vmatpush.msra.mxu0 0.0
    %1124 = vmatpush.msra.mxu0 0.0
    %1125 = vmatpush.msra.mxu0 0.0
    %1126 = vmatpush.msra.mxu0 %v1106
    %1127 = vmatmul.f32.gmra.mxu0 %v1109
    %v1128 = vpop.f32.mrf.mxu0
    %v1129 = vadd.f32 0.0, %v1128
    %1130 = vdwg.mxu0
    %1131 = vrot.lane.b32.xlu0 %v705, 64
    %v1132 = vpop.permute.xlu0 %1131
    %1133 = vrot.lane.b32.xlu0 %v705, 32
    %v1134 = vpop.permute.xlu0 %1133
    %v1135 = vsel %vm870, %v1132, 0
    %v1137 = vsel %vm870, %v1134, 0
    %1139 = vmatpush.xpose.msra.mxu0 0.0
    %1140 = vmatpush.xpose.msra.mxu0 0.0
    %1141 = vmatpush.xpose.msra.mxu0 0.0
    %1142 = vmatpush.xpose.msra.mxu0 0.0
    %1143 = vmatpush.xpose.msra.mxu0 0.0
    %1144 = vmatpush.xpose.msra.mxu0 0.0
    %1145 = vmatpush.xpose.msra.mxu0 0.0
    %1146 = vmatpush.xpose.msra.mxu0 0.0
    %1147 = vmatpush.xpose.msra.mxu0 0.0
    %1148 = vmatpush.xpose.msra.mxu0 0.0
    %1149 = vmatpush.xpose.msra.mxu0 0.0
    %1150 = vmatpush.xpose.msra.mxu0 0.0
    %1151 = vmatpush.xpose.msra.mxu0 0.0
    %1152 = vmatpush.xpose.msra.mxu0 0.0
    %1153 = vmatpush.xpose.msra.mxu0 0.0
    %1154 = vmatpush.xpose.msra.mxu0 %v1137
    %1155 = vmatmul.f32.gmra.mxu0 %v1135
    %v1156 = vpop.f32.mrf.mxu0
    %v1157 = vadd.f32 0.0, %v1156
    %1158 = vdwg.mxu0
    %v1159 = vmul.f32 %v1157, 0.25
    %v1160 = vsel %vm896, %v1159, -inf
    %1161 = vmax.xlane.f32.xlu0 %v1160
    %v1162 = vpop.xlane.xlu0 %1161
    %v1163 = vsub.f32 %v1159, %v1162
    %v1164 = vmul.f32 %v1163, 1.442695
    %v1165 = vpow.pop %v1164
    %v1166 = vsel %vm896, %v1165, 0.0
    %1167 = vadd.xlane.f32.xlu0 %v1166
    %v1168 = vpop.xlane.xlu0 %1167
    %v1169 = vrcp.pop %v1168
    %v1170 = vmul.f32 %v1165, %v1169
    %v1172 = vsel %vm896, %v1170, 0
    %1174 = vmatpush.msra.mxu0 0.0
    %1175 = vmatpush.msra.mxu0 0.0
    %1176 = vmatpush.msra.mxu0 0.0
    %1177 = vmatpush.msra.mxu0 0.0
    %1178 = vmatpush.msra.mxu0 0.0
    %1179 = vmatpush.msra.mxu0 0.0
    %1180 = vmatpush.msra.mxu0 0.0
    %1181 = vmatpush.msra.mxu0 0.0
    %1182 = vmatpush.msra.mxu0 0.0
    %1183 = vmatpush.msra.mxu0 0.0
    %1184 = vmatpush.msra.mxu0 0.0
    %1185 = vmatpush.msra.mxu0 0.0
    %1186 = vmatpush.msra.mxu0 0.0
    %1187 = vmatpush.msra.mxu0 0.0
    %1188 = vmatpush.msra.mxu0 0.0
    %1189 = vmatpush.msra.mxu0 %v745
    %1190 = vmatmul.f32.gmra.mxu0 %v1172
    %v1191 = vpop.f32.mrf.mxu0
    %v1192 = vadd.f32 0.0, %v1191
    %1193 = vdwg.mxu0
    %1194 = vrot.lane.b32.xlu0 %v705, 48
    %v1195 = vpop.permute.xlu0 %1194
    %1196 = vrot.lane.b32.xlu0 %v705, 16
    %v1197 = vpop.permute.xlu0 %1196
    %v1198 = vsel %vm870, %v1195, 0
    %v1200 = vsel %vm870, %v1197, 0
    %1202 = vmatpush.xpose.msra.mxu0 0.0
    %1203 = vmatpush.xpose.msra.mxu0 0.0
    %1204 = vmatpush.xpose.msra.mxu0 0.0
    %1205 = vmatpush.xpose.msra.mxu0 0.0
    %1206 = vmatpush.xpose.msra.mxu0 0.0
    %1207 = vmatpush.xpose.msra.mxu0 0.0
    %1208 = vmatpush.xpose.msra.mxu0 0.0
    %1209 = vmatpush.xpose.msra.mxu0 0.0
    %1210 = vmatpush.xpose.msra.mxu0 0.0
    %1211 = vmatpush.xpose.msra.mxu0 0.0
    %1212 = vmatpush.xpose.msra.mxu0 0.0
    %1213 = vmatpush.xpose.msra.mxu0 0.0
    %1214 = vmatpush.xpose.msra.mxu0 0.0
    %1215 = vmatpush.xpose.msra.mxu0 0.0
    %1216 = vmatpush.xpose.msra.mxu0 0.0
    %1217 = vmatpush.xpose.msra.mxu0 %v1200
    %1218 = vmatmul.f32.gmra.mxu0 %v1198
    %v1219 = vpop.f32.mrf.mxu0
    %v1220 = vadd.f32 0.0, %v1219
    %1221 = vdwg.mxu0
    %v1222 = vmul.f32 %v1220, 0.25
    %v1223 = vsel %vm896, %v1222, -inf
    %1224 = vmax.xlane.f32.xlu0 %v1223
    %v1225 = vpop.xlane.xlu0 %1224
    %v1226 = vsub.f32 %v1222, %v1225
    %v1227 = vmul.f32 %v1226, 1.442695
    %v1228 = vpow.pop %v1227
    %v1229 = vsel %vm896, %v1228, 0.0
    %1230 = vadd.xlane.f32.xlu0 %v1229
    %v1231 = vpop.xlane.xlu0 %1230
    %v1232 = vrcp.pop %v1231
    %v1233 = vmul.f32 %v1228, %v1232
    %1235 = vrot.lane.b32.xlu0 %v745, 112
    %v1236 = vpop.permute.xlu0 %1235
    %v1239 = vsel %vm896, %v1233, 0
    %1241 = vmatpush.msra.mxu0 0.0
    %1242 = vmatpush.msra.mxu0 0.0
    %1243 = vmatpush.msra.mxu0 0.0
    %1244 = vmatpush.msra.mxu0 0.0
    %1245 = vmatpush.msra.mxu0 0.0
    %1246 = vmatpush.msra.mxu0 0.0
    %1247 = vmatpush.msra.mxu0 0.0
    %1248 = vmatpush.msra.mxu0 0.0
    %1249 = vmatpush.msra.mxu0 0.0
    %1250 = vmatpush.msra.mxu0 0.0
    %1251 = vmatpush.msra.mxu0 0.0
    %1252 = vmatpush.msra.mxu0 0.0
    %1253 = vmatpush.msra.mxu0 0.0
    %1254 = vmatpush.msra.mxu0 0.0
    %1255 = vmatpush.msra.mxu0 0.0
    %1256 = vmatpush.msra.mxu0 %v1236
    %1257 = vmatmul.f32.gmra.mxu0 %v1239
    %v1258 = vpop.f32.mrf.mxu0
    %v1259 = vadd.f32 0.0, %v1258
    %1260 = vdwg.mxu0
    %1261 = vrot.lane.b32.xlu0 %v745, 96
    %v1262 = vpop.permute.xlu0 %1261
    %1263 = vrot.lane.b32.xlu0 %v745, 64
    %v1264 = vpop.permute.xlu0 %1263
    %v1265 = vsel %vm870, %v1262, 0
    %v1267 = vsel %vm870, %v1264, 0
    %1269 = vmatpush.xpose.msra.mxu0 0.0
    %1270 = vmatpush.xpose.msra.mxu0 0.0
    %1271 = vmatpush.xpose.msra.mxu0 0.0
    %1272 = vmatpush.xpose.msra.mxu0 0.0
    %1273 = vmatpush.xpose.msra.mxu0 0.0
    %1274 = vmatpush.xpose.msra.mxu0 0.0
    %1275 = vmatpush.xpose.msra.mxu0 0.0
    %1276 = vmatpush.xpose.msra.mxu0 0.0
    %1277 = vmatpush.xpose.msra.mxu0 0.0
    %1278 = vmatpush.xpose.msra.mxu0 0.0
    %1279 = vmatpush.xpose.msra.mxu0 0.0
    %1280 = vmatpush.xpose.msra.mxu0 0.0
    %1281 = vmatpush.xpose.msra.mxu0 0.0
    %1282 = vmatpush.xpose.msra.mxu0 0.0
    %1283 = vmatpush.xpose.msra.mxu0 0.0
    %1284 = vmatpush.xpose.msra.mxu0 %v1267
    %1285 = vmatmul.f32.gmra.mxu0 %v1265
    %v1286 = vpop.f32.mrf.mxu0
    %v1287 = vadd.f32 0.0, %v1286
    %1288 = vdwg.mxu0
    %v1289 = vmul.f32 %v1287, 0.25
    %v1290 = vsel %vm896, %v1289, -inf
    %1291 = vmax.xlane.f32.xlu0 %v1290
    %v1292 = vpop.xlane.xlu0 %1291
    %v1293 = vsub.f32 %v1289, %v1292
    %v1294 = vmul.f32 %v1293, 1.442695
    %v1295 = vpow.pop %v1294
    %v1296 = vsel %vm896, %v1295, 0.0
    %1297 = vadd.xlane.f32.xlu0 %v1296
    %v1298 = vpop.xlane.xlu0 %1297
    %v1299 = vrcp.pop %v1298
    %v1300 = vmul.f32 %v1295, %v1299
    %1301 = vrot.lane.b32.xlu0 %v745, 32
    %v1302 = vpop.permute.xlu0 %1301
    %v1305 = vsel %vm896, %v1300, 0
    %1307 = vmatpush.msra.mxu0 0.0
    %1308 = vmatpush.msra.mxu0 0.0
    %1309 = vmatpush.msra.mxu0 0.0
    %1310 = vmatpush.msra.mxu0 0.0
    %1311 = vmatpush.msra.mxu0 0.0
    %1312 = vmatpush.msra.mxu0 0.0
    %1313 = vmatpush.msra.mxu0 0.0
    %1314 = vmatpush.msra.mxu0 0.0
    %1315 = vmatpush.msra.mxu0 0.0
    %1316 = vmatpush.msra.mxu0 0.0
    %1317 = vmatpush.msra.mxu0 0.0
    %1318 = vmatpush.msra.mxu0 0.0
    %1319 = vmatpush.msra.mxu0 0.0
    %1320 = vmatpush.msra.mxu0 0.0
    %1321 = vmatpush.msra.mxu0 0.0
    %1322 = vmatpush.msra.mxu0 %v1302
    %1323 = vmatmul.f32.gmra.mxu0 %v1305
    %v1324 = vpop.f32.mrf.mxu0
    %v1325 = vadd.f32 0.0, %v1324
    %1326 = vdwg.mxu0
    %1327 = vrot.lane.b32.xlu0 %v745, 80
    %v1328 = vpop.permute.xlu0 %1327
    %1329 = vrot.lane.b32.xlu0 %v745, 48
    %v1330 = vpop.permute.xlu0 %1329
    %v1331 = vsel %vm870, %v1328, 0
    %v1333 = vsel %vm870, %v1330, 0
    %1335 = vmatpush.xpose.msra.mxu0 0.0
    %1336 = vmatpush.xpose.msra.mxu0 0.0
    %1337 = vmatpush.xpose.msra.mxu0 0.0
    %1338 = vmatpush.xpose.msra.mxu0 0.0
    %1339 = vmatpush.xpose.msra.mxu0 0.0
    %1340 = vmatpush.xpose.msra.mxu0 0.0
    %1341 = vmatpush.xpose.msra.mxu0 0.0
    %1342 = vmatpush.xpose.msra.mxu0 0.0
    %1343 = vmatpush.xpose.msra.mxu0 0.0
    %1344 = vmatpush.xpose.msra.mxu0 0.0
    %1345 = vmatpush.xpose.msra.mxu0 0.0
    %1346 = vmatpush.xpose.msra.mxu0 0.0
    %1347 = vmatpush.xpose.msra.mxu0 0.0
    %1348 = vmatpush.xpose.msra.mxu0 0.0
    %1349 = vmatpush.xpose.msra.mxu0 0.0
    %1350 = vmatpush.xpose.msra.mxu0 %v1333
    %1351 = vmatmul.f32.gmra.mxu0 %v1331
    %v1352 = vpop.f32.mrf.mxu0
    %v1353 = vadd.f32 0.0, %v1352
    %1354 = vdwg.mxu0
    %v1355 = vmul.f32 %v1353, 0.25
    %v1356 = vsel %vm896, %v1355, -inf
    %1357 = vmax.xlane.f32.xlu0 %v1356
    %v1358 = vpop.xlane.xlu0 %1357
    %v1359 = vsub.f32 %v1355, %v1358
    %v1360 = vmul.f32 %v1359, 1.442695
    %v1361 = vpow.pop %v1360
    %v1362 = vsel %vm896, %v1361, 0.0
    %1363 = vadd.xlane.f32.xlu0 %v1362
    %v1364 = vpop.xlane.xlu0 %1363
    %v1365 = vrcp.pop %v1364
    %v1366 = vmul.f32 %v1361, %v1365
    %1367 = vrot.lane.b32.xlu0 %v745, 16
    %v1368 = vpop.permute.xlu0 %1367
    %v1371 = vsel %vm896, %v1366, 0
    %1373 = vmatpush.msra.mxu0 0.0
    %1374 = vmatpush.msra.mxu0 0.0
    %1375 = vmatpush.msra.mxu0 0.0
    %1376 = vmatpush.msra.mxu0 0.0
    %1377 = vmatpush.msra.mxu0 0.0
    %1378 = vmatpush.msra.mxu0 0.0
    %1379 = vmatpush.msra.mxu0 0.0
    %1380 = vmatpush.msra.mxu0 0.0
    %1381 = vmatpush.msra.mxu0 0.0
    %1382 = vmatpush.msra.mxu0 0.0
    %1383 = vmatpush.msra.mxu0 0.0
    %1384 = vmatpush.msra.mxu0 0.0
    %1385 = vmatpush.msra.mxu0 0.0
    %1386 = vmatpush.msra.mxu0 0.0
    %1387 = vmatpush.msra.mxu0 0.0
    %1388 = vmatpush.msra.mxu0 %v1368
    %1389 = vmatmul.f32.gmra.mxu0 %v1371
    %v1390 = vpop.f32.mrf.mxu0
    %v1391 = vadd.f32 0.0, %v1390
    %1392 = vdwg.mxu0
    %1394 = vrot.lane.b32.xlu0 %v785, 96
    %v1395 = vpop.permute.xlu0 %1394
    %v1396 = vsel %vm870, %v785, 0
    %v1398 = vsel %vm870, %v1395, 0
    %1400 = vmatpush.xpose.msra.mxu0 0.0
    %1401 = vmatpush.xpose.msra.mxu0 0.0
    %1402 = vmatpush.xpose.msra.mxu0 0.0
    %1403 = vmatpush.xpose.msra.mxu0 0.0
    %1404 = vmatpush.xpose.msra.mxu0 0.0
    %1405 = vmatpush.xpose.msra.mxu0 0.0
    %1406 = vmatpush.xpose.msra.mxu0 0.0
    %1407 = vmatpush.xpose.msra.mxu0 0.0
    %1408 = vmatpush.xpose.msra.mxu0 0.0
    %1409 = vmatpush.xpose.msra.mxu0 0.0
    %1410 = vmatpush.xpose.msra.mxu0 0.0
    %1411 = vmatpush.xpose.msra.mxu0 0.0
    %1412 = vmatpush.xpose.msra.mxu0 0.0
    %1413 = vmatpush.xpose.msra.mxu0 0.0
    %1414 = vmatpush.xpose.msra.mxu0 0.0
    %1415 = vmatpush.xpose.msra.mxu0 %v1398
    %1416 = vmatmul.f32.gmra.mxu0 %v1396
    %v1417 = vpop.f32.mrf.mxu0
    %v1418 = vadd.f32 0.0, %v1417
    %1419 = vdwg.mxu0
    %v1420 = vmul.f32 %v1418, 0.25
    %v1421 = vsel %vm896, %v1420, -inf
    %1422 = vmax.xlane.f32.xlu0 %v1421
    %v1423 = vpop.xlane.xlu0 %1422
    %v1424 = vsub.f32 %v1420, %v1423
    %v1425 = vmul.f32 %v1424, 1.442695
    %v1426 = vpow.pop %v1425
    %v1427 = vsel %vm896, %v1426, 0.0
    %1428 = vadd.xlane.f32.xlu0 %v1427
    %v1429 = vpop.xlane.xlu0 %1428
    %v1430 = vrcp.pop %v1429
    %v1431 = vmul.f32 %v1426, %v1430
    %1432 = vrot.lane.b32.xlu0 %v785, 64
    %v1433 = vpop.permute.xlu0 %1432
    %v1436 = vsel %vm896, %v1431, 0
    %1438 = vmatpush.msra.mxu0 0.0
    %1439 = vmatpush.msra.mxu0 0.0
    %1440 = vmatpush.msra.mxu0 0.0
    %1441 = vmatpush.msra.mxu0 0.0
    %1442 = vmatpush.msra.mxu0 0.0
    %1443 = vmatpush.msra.mxu0 0.0
    %1444 = vmatpush.msra.mxu0 0.0
    %1445 = vmatpush.msra.mxu0 0.0
    %1446 = vmatpush.msra.mxu0 0.0
    %1447 = vmatpush.msra.mxu0 0.0
    %1448 = vmatpush.msra.mxu0 0.0
    %1449 = vmatpush.msra.mxu0 0.0
    %1450 = vmatpush.msra.mxu0 0.0
    %1451 = vmatpush.msra.mxu0 0.0
    %1452 = vmatpush.msra.mxu0 0.0
    %1453 = vmatpush.msra.mxu0 %v1433
    %1454 = vmatmul.f32.gmra.mxu0 %v1436
    %v1455 = vpop.f32.mrf.mxu0
    %v1456 = vadd.f32 0.0, %v1455
    %1457 = vdwg.mxu0
    %1458 = vrot.lane.b32.xlu0 %v785, 112
    %v1459 = vpop.permute.xlu0 %1458
    %1460 = vrot.lane.b32.xlu0 %v785, 80
    %v1461 = vpop.permute.xlu0 %1460
    %v1462 = vsel %vm870, %v1459, 0
    %v1464 = vsel %vm870, %v1461, 0
    %1466 = vmatpush.xpose.msra.mxu0 0.0
    %1467 = vmatpush.xpose.msra.mxu0 0.0
    %1468 = vmatpush.xpose.msra.mxu0 0.0
    %1469 = vmatpush.xpose.msra.mxu0 0.0
    %1470 = vmatpush.xpose.msra.mxu0 0.0
    %1471 = vmatpush.xpose.msra.mxu0 0.0
    %1472 = vmatpush.xpose.msra.mxu0 0.0
    %1473 = vmatpush.xpose.msra.mxu0 0.0
    %1474 = vmatpush.xpose.msra.mxu0 0.0
    %1475 = vmatpush.xpose.msra.mxu0 0.0
    %1476 = vmatpush.xpose.msra.mxu0 0.0
    %1477 = vmatpush.xpose.msra.mxu0 0.0
    %1478 = vmatpush.xpose.msra.mxu0 0.0
    %1479 = vmatpush.xpose.msra.mxu0 0.0
    %1480 = vmatpush.xpose.msra.mxu0 0.0
    %1481 = vmatpush.xpose.msra.mxu0 %v1464
    %1482 = vmatmul.f32.gmra.mxu0 %v1462
    %v1483 = vpop.f32.mrf.mxu0
    %v1484 = vadd.f32 0.0, %v1483
    %1485 = vdwg.mxu0
    %v1486 = vmul.f32 %v1484, 0.25
    %v1487 = vsel %vm896, %v1486, -inf
    %1488 = vmax.xlane.f32.xlu0 %v1487
    %v1489 = vpop.xlane.xlu0 %1488
    %v1490 = vsub.f32 %v1486, %v1489
    %v1491 = vmul.f32 %v1490, 1.442695
    %v1492 = vpow.pop %v1491
    %v1493 = vsel %vm896, %v1492, 0.0
    %1494 = vadd.xlane.f32.xlu0 %v1493
    %v1495 = vpop.xlane.xlu0 %1494
    %v1496 = vrcp.pop %v1495
    %v1497 = vmul.f32 %v1492, %v1496
    %1498 = vrot.lane.b32.xlu0 %v785, 48
    %v1499 = vpop.permute.xlu0 %1498
    %v1502 = vsel %vm896, %v1497, 0
    %1504 = vmatpush.msra.mxu0 0.0
    %1505 = vmatpush.msra.mxu0 0.0
    %1506 = vmatpush.msra.mxu0 0.0
    %1507 = vmatpush.msra.mxu0 0.0
    %1508 = vmatpush.msra.mxu0 0.0
    %1509 = vmatpush.msra.mxu0 0.0
    %1510 = vmatpush.msra.mxu0 0.0
    %1511 = vmatpush.msra.mxu0 0.0
    %1512 = vmatpush.msra.mxu0 0.0
    %1513 = vmatpush.msra.mxu0 0.0
    %1514 = vmatpush.msra.mxu0 0.0
    %1515 = vmatpush.msra.mxu0 0.0
    %1516 = vmatpush.msra.mxu0 0.0
    %1517 = vmatpush.msra.mxu0 0.0
    %1518 = vmatpush.msra.mxu0 0.0
    %1519 = vmatpush.msra.mxu0 %v1499
    %1520 = vmatmul.f32.gmra.mxu0 %v1502
    %v1521 = vpop.f32.mrf.mxu0
    %v1522 = vadd.f32 0.0, %v1521
    %1523 = vdwg.mxu0
    %1524 = vrot.lane.b32.xlu0 %v785, 32
    %v1525 = vpop.permute.xlu0 %1524
    %v1526 = vsel %vm870, %v1525, 0
    %v1529 = vsel %vm870, %v825, 0
    %1531 = vmatpush.xpose.msra.mxu0 0.0
    %1532 = vmatpush.xpose.msra.mxu0 0.0
    %1533 = vmatpush.xpose.msra.mxu0 0.0
    %1534 = vmatpush.xpose.msra.mxu0 0.0
    %1535 = vmatpush.xpose.msra.mxu0 0.0
    %1536 = vmatpush.xpose.msra.mxu0 0.0
    %1537 = vmatpush.xpose.msra.mxu0 0.0
    %1538 = vmatpush.xpose.msra.mxu0 0.0
    %1539 = vmatpush.xpose.msra.mxu0 0.0
    %1540 = vmatpush.xpose.msra.mxu0 0.0
    %1541 = vmatpush.xpose.msra.mxu0 0.0
    %1542 = vmatpush.xpose.msra.mxu0 0.0
    %1543 = vmatpush.xpose.msra.mxu0 0.0
    %1544 = vmatpush.xpose.msra.mxu0 0.0
    %1545 = vmatpush.xpose.msra.mxu0 0.0
    %1546 = vmatpush.xpose.msra.mxu0 %v1529
    %1547 = vmatmul.f32.gmra.mxu0 %v1526
    %v1548 = vpop.f32.mrf.mxu0
    %v1549 = vadd.f32 0.0, %v1548
    %1550 = vdwg.mxu0
    %v1551 = vmul.f32 %v1549, 0.25
    %v1552 = vsel %vm896, %v1551, -inf
    %1553 = vmax.xlane.f32.xlu0 %v1552
    %v1554 = vpop.xlane.xlu0 %1553
    %v1555 = vsub.f32 %v1551, %v1554
    %v1556 = vmul.f32 %v1555, 1.442695
    %v1557 = vpow.pop %v1556
    %v1558 = vsel %vm896, %v1557, 0.0
    %1559 = vadd.xlane.f32.xlu0 %v1558
    %v1560 = vpop.xlane.xlu0 %1559
    %v1561 = vrcp.pop %v1560
    %v1562 = vmul.f32 %v1557, %v1561
    %1563 = vrot.lane.b32.xlu0 %v825, 96
    %v1564 = vpop.permute.xlu0 %1563
    %v1567 = vsel %vm896, %v1562, 0
    %1569 = vmatpush.msra.mxu0 0.0
    %1570 = vmatpush.msra.mxu0 0.0
    %1571 = vmatpush.msra.mxu0 0.0
    %1572 = vmatpush.msra.mxu0 0.0
    %1573 = vmatpush.msra.mxu0 0.0
    %1574 = vmatpush.msra.mxu0 0.0
    %1575 = vmatpush.msra.mxu0 0.0
    %1576 = vmatpush.msra.mxu0 0.0
    %1577 = vmatpush.msra.mxu0 0.0
    %1578 = vmatpush.msra.mxu0 0.0
    %1579 = vmatpush.msra.mxu0 0.0
    %1580 = vmatpush.msra.mxu0 0.0
    %1581 = vmatpush.msra.mxu0 0.0
    %1582 = vmatpush.msra.mxu0 0.0
    %1583 = vmatpush.msra.mxu0 0.0
    %1584 = vmatpush.msra.mxu0 %v1564
    %1585 = vmatmul.f32.gmra.mxu0 %v1567
    %v1586 = vpop.f32.mrf.mxu0
    %v1587 = vadd.f32 0.0, %v1586
    %1588 = vdwg.mxu0
    %1589 = vrot.lane.b32.xlu0 %v785, 16
    %v1590 = vpop.permute.xlu0 %1589
    %1591 = vrot.lane.b32.xlu0 %v825, 112
    %v1592 = vpop.permute.xlu0 %1591
    %v1593 = vsel %vm870, %v1590, 0
    %v1595 = vsel %vm870, %v1592, 0
    %1597 = vmatpush.xpose.msra.mxu0 0.0
    %1598 = vmatpush.xpose.msra.mxu0 0.0
    %1599 = vmatpush.xpose.msra.mxu0 0.0
    %1600 = vmatpush.xpose.msra.mxu0 0.0
    %1601 = vmatpush.xpose.msra.mxu0 0.0
    %1602 = vmatpush.xpose.msra.mxu0 0.0
    %1603 = vmatpush.xpose.msra.mxu0 0.0
    %1604 = vmatpush.xpose.msra.mxu0 0.0
    %1605 = vmatpush.xpose.msra.mxu0 0.0
    %1606 = vmatpush.xpose.msra.mxu0 0.0
    %1607 = vmatpush.xpose.msra.mxu0 0.0
    %1608 = vmatpush.xpose.msra.mxu0 0.0
    %1609 = vmatpush.xpose.msra.mxu0 0.0
    %1610 = vmatpush.xpose.msra.mxu0 0.0
    %1611 = vmatpush.xpose.msra.mxu0 0.0
    %1612 = vmatpush.xpose.msra.mxu0 %v1595
    %1613 = vmatmul.f32.gmra.mxu0 %v1593
    %v1614 = vpop.f32.mrf.mxu0
    %v1615 = vadd.f32 0.0, %v1614
    %1616 = vdwg.mxu0
    %v1617 = vmul.f32 %v1615, 0.25
    %v1618 = vsel %vm896, %v1617, -inf
    %1619 = vmax.xlane.f32.xlu0 %v1618
    %v1620 = vpop.xlane.xlu0 %1619
    %v1621 = vsub.f32 %v1617, %v1620
    %v1622 = vmul.f32 %v1621, 1.442695
    %v1623 = vpow.pop %v1622
    %v1624 = vsel %vm896, %v1623, 0.0
    %1625 = vadd.xlane.f32.xlu0 %v1624
    %v1626 = vpop.xlane.xlu0 %1625
    %v1627 = vrcp.pop %v1626
    %v1628 = vmul.f32 %v1623, %v1627
    %1629 = vrot.lane.b32.xlu0 %v825, 80
    %v1630 = vpop.permute.xlu0 %1629
    %v1633 = vsel %vm896, %v1628, 0
    %1635 = vmatpush.msra.mxu0 0.0
    %1636 = vmatpush.msra.mxu0 0.0
    %1637 = vmatpush.msra.mxu0 0.0
    %1638 = vmatpush.msra.mxu0 0.0
    %1639 = vmatpush.msra.mxu0 0.0
    %1640 = vmatpush.msra.mxu0 0.0
    %1641 = vmatpush.msra.mxu0 0.0
    %1642 = vmatpush.msra.mxu0 0.0
    %1643 = vmatpush.msra.mxu0 0.0
    %1644 = vmatpush.msra.mxu0 0.0
    %1645 = vmatpush.msra.mxu0 0.0
    %1646 = vmatpush.msra.mxu0 0.0
    %1647 = vmatpush.msra.mxu0 0.0
    %1648 = vmatpush.msra.mxu0 0.0
    %1649 = vmatpush.msra.mxu0 0.0
    %1650 = vmatpush.msra.mxu0 %v1630
    %1651 = vmatmul.f32.gmra.mxu0 %v1633
    %v1652 = vpop.f32.mrf.mxu0
    %v1653 = vadd.f32 0.0, %v1652
    %1654 = vdwg.mxu0
    %1655 = vrot.lane.b32.xlu0 %v825, 64
    %v1656 = vpop.permute.xlu0 %1655
    %1657 = vrot.lane.b32.xlu0 %v825, 32
    %v1658 = vpop.permute.xlu0 %1657
    %v1659 = vsel %vm870, %v1656, 0
    %v1661 = vsel %vm870, %v1658, 0
    %1663 = vmatpush.xpose.msra.mxu0 0.0
    %1664 = vmatpush.xpose.msra.mxu0 0.0
    %1665 = vmatpush.xpose.msra.mxu0 0.0
    %1666 = vmatpush.xpose.msra.mxu0 0.0
    %1667 = vmatpush.xpose.msra.mxu0 0.0
    %1668 = vmatpush.xpose.msra.mxu0 0.0
    %1669 = vmatpush.xpose.msra.mxu0 0.0
    %1670 = vmatpush.xpose.msra.mxu0 0.0
    %1671 = vmatpush.xpose.msra.mxu0 0.0
    %1672 = vmatpush.xpose.msra.mxu0 0.0
    %1673 = vmatpush.xpose.msra.mxu0 0.0
    %1674 = vmatpush.xpose.msra.mxu0 0.0
    %1675 = vmatpush.xpose.msra.mxu0 0.0
    %1676 = vmatpush.xpose.msra.mxu0 0.0
    %1677 = vmatpush.xpose.msra.mxu0 0.0
    %1678 = vmatpush.xpose.msra.mxu0 %v1661
    %1679 = vmatmul.f32.gmra.mxu0 %v1659
    %v1680 = vpop.f32.mrf.mxu0
    %v1681 = vadd.f32 0.0, %v1680
    %1682 = vdwg.mxu0
    %v1683 = vmul.f32 %v1681, 0.25
    %v1684 = vsel %vm896, %v1683, -inf
    %1685 = vmax.xlane.f32.xlu0 %v1684
    %v1686 = vpop.xlane.xlu0 %1685
    %v1687 = vsub.f32 %v1683, %v1686
    %v1688 = vmul.f32 %v1687, 1.442695
    %v1689 = vpow.pop %v1688
    %v1690 = vsel %vm896, %v1689, 0.0
    %1691 = vadd.xlane.f32.xlu0 %v1690
    %v1692 = vpop.xlane.xlu0 %1691
    %v1693 = vrcp.pop %v1692
    %v1694 = vmul.f32 %v1689, %v1693
    %v1696 = vsel %vm896, %v1694, 0
    %1698 = vmatpush.msra.mxu0 0.0
    %1699 = vmatpush.msra.mxu0 0.0
    %1700 = vmatpush.msra.mxu0 0.0
    %1701 = vmatpush.msra.mxu0 0.0
    %1702 = vmatpush.msra.mxu0 0.0
    %1703 = vmatpush.msra.mxu0 0.0
    %1704 = vmatpush.msra.mxu0 0.0
    %1705 = vmatpush.msra.mxu0 0.0
    %1706 = vmatpush.msra.mxu0 0.0
    %1707 = vmatpush.msra.mxu0 0.0
    %1708 = vmatpush.msra.mxu0 0.0
    %1709 = vmatpush.msra.mxu0 0.0
    %1710 = vmatpush.msra.mxu0 0.0
    %1711 = vmatpush.msra.mxu0 0.0
    %1712 = vmatpush.msra.mxu0 0.0
    %1713 = vmatpush.msra.mxu0 %v865
    %1714 = vmatmul.f32.gmra.mxu0 %v1696
    %v1715 = vpop.f32.mrf.mxu0
    %v1716 = vadd.f32 0.0, %v1715
    %1717 = vdwg.mxu0
    %1718 = vrot.lane.b32.xlu0 %v825, 48
    %v1719 = vpop.permute.xlu0 %1718
    %1720 = vrot.lane.b32.xlu0 %v825, 16
    %v1721 = vpop.permute.xlu0 %1720
    %v1722 = vsel %vm870, %v1719, 0
    %v1724 = vsel %vm870, %v1721, 0
    %1726 = vmatpush.xpose.msra.mxu0 0.0
    %1727 = vmatpush.xpose.msra.mxu0 0.0
    %1728 = vmatpush.xpose.msra.mxu0 0.0
    %1729 = vmatpush.xpose.msra.mxu0 0.0
    %1730 = vmatpush.xpose.msra.mxu0 0.0
    %1731 = vmatpush.xpose.msra.mxu0 0.0
    %1732 = vmatpush.xpose.msra.mxu0 0.0
    %1733 = vmatpush.xpose.msra.mxu0 0.0
    %1734 = vmatpush.xpose.msra.mxu0 0.0
    %1735 = vmatpush.xpose.msra.mxu0 0.0
    %1736 = vmatpush.xpose.msra.mxu0 0.0
    %1737 = vmatpush.xpose.msra.mxu0 0.0
    %1738 = vmatpush.xpose.msra.mxu0 0.0
    %1739 = vmatpush.xpose.msra.mxu0 0.0
    %1740 = vmatpush.xpose.msra.mxu0 0.0
    %1741 = vmatpush.xpose.msra.mxu0 %v1724
    %1742 = vmatmul.f32.gmra.mxu0 %v1722
    %v1743 = vpop.f32.mrf.mxu0
    %v1744 = vadd.f32 0.0, %v1743
    %1745 = vdwg.mxu0
    %v1746 = vmul.f32 %v1744, 0.25
    %v1747 = vsel %vm896, %v1746, -inf
    %1748 = vmax.xlane.f32.xlu0 %v1747
    %v1749 = vpop.xlane.xlu0 %1748
    %v1750 = vsub.f32 %v1746, %v1749
    %v1751 = vmul.f32 %v1750, 1.442695
    %v1752 = vpow.pop %v1751
    %v1753 = vsel %vm896, %v1752, 0.0
    %1754 = vadd.xlane.f32.xlu0 %v1753
    %v1755 = vpop.xlane.xlu0 %1754
    %v1756 = vrcp.pop %v1755
    %v1757 = vmul.f32 %v1752, %v1756
    %1759 = vrot.lane.b32.xlu0 %v865, 112
    %v1760 = vpop.permute.xlu0 %1759
    %v1763 = vsel %vm896, %v1757, 0
    %1765 = vmatpush.msra.mxu0 0.0
    %1766 = vmatpush.msra.mxu0 0.0
    %1767 = vmatpush.msra.mxu0 0.0
    %1768 = vmatpush.msra.mxu0 0.0
    %1769 = vmatpush.msra.mxu0 0.0
    %1770 = vmatpush.msra.mxu0 0.0
    %1771 = vmatpush.msra.mxu0 0.0
    %1772 = vmatpush.msra.mxu0 0.0
    %1773 = vmatpush.msra.mxu0 0.0
    %1774 = vmatpush.msra.mxu0 0.0
    %1775 = vmatpush.msra.mxu0 0.0
    %1776 = vmatpush.msra.mxu0 0.0
    %1777 = vmatpush.msra.mxu0 0.0
    %1778 = vmatpush.msra.mxu0 0.0
    %1779 = vmatpush.msra.mxu0 0.0
    %1780 = vmatpush.msra.mxu0 %v1760
    %1781 = vmatmul.f32.gmra.mxu0 %v1763
    %v1782 = vpop.f32.mrf.mxu0
    %v1783 = vadd.f32 0.0, %v1782
    %1784 = vdwg.mxu0
    %1785 = vrot.lane.b32.xlu0 %v865, 96
    %v1786 = vpop.permute.xlu0 %1785
    %1787 = vrot.lane.b32.xlu0 %v865, 64
    %v1788 = vpop.permute.xlu0 %1787
    %v1789 = vsel %vm870, %v1786, 0
    %v1791 = vsel %vm870, %v1788, 0
    %1793 = vmatpush.xpose.msra.mxu0 0.0
    %1794 = vmatpush.xpose.msra.mxu0 0.0
    %1795 = vmatpush.xpose.msra.mxu0 0.0
    %1796 = vmatpush.xpose.msra.mxu0 0.0
    %1797 = vmatpush.xpose.msra.mxu0 0.0
    %1798 = vmatpush.xpose.msra.mxu0 0.0
    %1799 = vmatpush.xpose.msra.mxu0 0.0
    %1800 = vmatpush.xpose.msra.mxu0 0.0
    %1801 = vmatpush.xpose.msra.mxu0 0.0
    %1802 = vmatpush.xpose.msra.mxu0 0.0
    %1803 = vmatpush.xpose.msra.mxu0 0.0
    %1804 = vmatpush.xpose.msra.mxu0 0.0
    %1805 = vmatpush.xpose.msra.mxu0 0.0
    %1806 = vmatpush.xpose.msra.mxu0 0.0
    %1807 = vmatpush.xpose.msra.mxu0 0.0
    %1808 = vmatpush.xpose.msra.mxu0 %v1791
    %1809 = vmatmul.f32.gmra.mxu0 %v1789
    %v1810 = vpop.f32.mrf.mxu0
    %v1811 = vadd.f32 0.0, %v1810
    %1812 = vdwg.mxu0
    %v1813 = vmul.f32 %v1811, 0.25
    %v1814 = vsel %vm896, %v1813, -inf
    %1815 = vmax.xlane.f32.xlu0 %v1814
    %v1816 = vpop.xlane.xlu0 %1815
    %v1817 = vsub.f32 %v1813, %v1816
    %v1818 = vmul.f32 %v1817, 1.442695
    %v1819 = vpow.pop %v1818
    %v1820 = vsel %vm896, %v1819, 0.0
    %1821 = vadd.xlane.f32.xlu0 %v1820
    %v1822 = vpop.xlane.xlu0 %1821
    %v1823 = vrcp.pop %v1822
    %v1824 = vmul.f32 %v1819, %v1823
    %1825 = vrot.lane.b32.xlu0 %v865, 32
    %v1826 = vpop.permute.xlu0 %1825
    %v1829 = vsel %vm896, %v1824, 0
    %1831 = vmatpush.msra.mxu0 0.0
    %1832 = vmatpush.msra.mxu0 0.0
    %1833 = vmatpush.msra.mxu0 0.0
    %1834 = vmatpush.msra.mxu0 0.0
    %1835 = vmatpush.msra.mxu0 0.0
    %1836 = vmatpush.msra.mxu0 0.0
    %1837 = vmatpush.msra.mxu0 0.0
    %1838 = vmatpush.msra.mxu0 0.0
    %1839 = vmatpush.msra.mxu0 0.0
    %1840 = vmatpush.msra.mxu0 0.0
    %1841 = vmatpush.msra.mxu0 0.0
    %1842 = vmatpush.msra.mxu0 0.0
    %1843 = vmatpush.msra.mxu0 0.0
    %1844 = vmatpush.msra.mxu0 0.0
    %1845 = vmatpush.msra.mxu0 0.0
    %1846 = vmatpush.msra.mxu0 %v1826
    %1847 = vmatmul.f32.gmra.mxu0 %v1829
    %v1848 = vpop.f32.mrf.mxu0
    %v1849 = vadd.f32 0.0, %v1848
    %1850 = vdwg.mxu0
    %1851 = vrot.lane.b32.xlu0 %v865, 80
    %v1852 = vpop.permute.xlu0 %1851
    %1853 = vrot.lane.b32.xlu0 %v865, 48
    %v1854 = vpop.permute.xlu0 %1853
    %v1855 = vsel %vm870, %v1852, 0
    %v1857 = vsel %vm870, %v1854, 0
    %1859 = vmatpush.xpose.msra.mxu0 0.0
    %1860 = vmatpush.xpose.msra.mxu0 0.0
    %1861 = vmatpush.xpose.msra.mxu0 0.0
    %1862 = vmatpush.xpose.msra.mxu0 0.0
    %1863 = vmatpush.xpose.msra.mxu0 0.0
    %1864 = vmatpush.xpose.msra.mxu0 0.0
    %1865 = vmatpush.xpose.msra.mxu0 0.0
    %1866 = vmatpush.xpose.msra.mxu0 0.0
    %1867 = vmatpush.xpose.msra.mxu0 0.0
    %1868 = vmatpush.xpose.msra.mxu0 0.0
    %1869 = vmatpush.xpose.msra.mxu0 0.0
    %1870 = vmatpush.xpose.msra.mxu0 0.0
    %1871 = vmatpush.xpose.msra.mxu0 0.0
    %1872 = vmatpush.xpose.msra.mxu0 0.0
    %1873 = vmatpush.xpose.msra.mxu0 0.0
    %1874 = vmatpush.xpose.msra.mxu0 %v1857
    %1875 = vmatmul.f32.gmra.mxu0 %v1855
    %v1876 = vpop.f32.mrf.mxu0
    %v1877 = vadd.f32 0.0, %v1876
    %1878 = vdwg.mxu0
    %v1879 = vmul.f32 %v1877, 0.25
    %v1880 = vsel %vm896, %v1879, -inf
    %1881 = vmax.xlane.f32.xlu0 %v1880
    %v1882 = vpop.xlane.xlu0 %1881
    %v1883 = vsub.f32 %v1879, %v1882
    %v1884 = vmul.f32 %v1883, 1.442695
    %v1885 = vpow.pop %v1884
    %v1886 = vsel %vm896, %v1885, 0.0
    %1887 = vadd.xlane.f32.xlu0 %v1886
    %v1888 = vpop.xlane.xlu0 %1887
    %v1889 = vrcp.pop %v1888
    %v1890 = vmul.f32 %v1885, %v1889
    %1891 = vrot.lane.b32.xlu0 %v865, 16
    %v1892 = vpop.permute.xlu0 %1891
    %v1895 = vsel %vm896, %v1890, 0
    %1897 = vmatpush.msra.mxu0 0.0
    %1898 = vmatpush.msra.mxu0 0.0
    %1899 = vmatpush.msra.mxu0 0.0
    %1900 = vmatpush.msra.mxu0 0.0
    %1901 = vmatpush.msra.mxu0 0.0
    %1902 = vmatpush.msra.mxu0 0.0
    %1903 = vmatpush.msra.mxu0 0.0
    %1904 = vmatpush.msra.mxu0 0.0
    %1905 = vmatpush.msra.mxu0 0.0
    %1906 = vmatpush.msra.mxu0 0.0
    %1907 = vmatpush.msra.mxu0 0.0
    %1908 = vmatpush.msra.mxu0 0.0
    %1909 = vmatpush.msra.mxu0 0.0
    %1910 = vmatpush.msra.mxu0 0.0
    %1911 = vmatpush.msra.mxu0 0.0
    %1912 = vmatpush.msra.mxu0 %v1892
    %1913 = vmatmul.f32.gmra.mxu0 %v1895
    %v1914 = vpop.f32.mrf.mxu0
    %v1915 = vadd.f32 0.0, %v1914
    %1916 = vdwg.mxu0
    %1918 = vrot.lane.b32.xlu0 %v998, 16
    %v1919 = vpop.permute.xlu0 %1918
    %1922 = vrot.lane.b32.xlu0 %v1063, 32
    %v1923 = vpop.permute.xlu0 %1922
    %1926 = vrot.lane.b32.xlu0 %v1129, 48
    %v1927 = vpop.permute.xlu0 %1926
    %1930 = vrot.lane.b32.xlu0 %v1192, 64
    %v1931 = vpop.permute.xlu0 %1930
    %1934 = vrot.lane.b32.xlu0 %v1259, 80
    %v1935 = vpop.permute.xlu0 %1934
    %1938 = vrot.lane.b32.xlu0 %v1325, 96
    %v1939 = vpop.permute.xlu0 %1938
    %1942 = vrot.lane.b32.xlu0 %v1391, 112
    %v1943 = vpop.permute.xlu0 %1942
    %1946 = vrot.lane.b32.xlu0 %v1522, 16
    %v1947 = vpop.permute.xlu0 %1946
    %1950 = vrot.lane.b32.xlu0 %v1587, 32
    %v1951 = vpop.permute.xlu0 %1950
    %1954 = vrot.lane.b32.xlu0 %v1653, 48
    %v1955 = vpop.permute.xlu0 %1954
    %1958 = vrot.lane.b32.xlu0 %v1716, 64
    %v1959 = vpop.permute.xlu0 %1958
    %1962 = vrot.lane.b32.xlu0 %v1783, 80
    %v1963 = vpop.permute.xlu0 %1962
    %1966 = vrot.lane.b32.xlu0 %v1849, 96
    %v1967 = vpop.permute.xlu0 %1966
    %1970 = vrot.lane.b32.xlu0 %v1915, 112
    %v1971 = vpop.permute.xlu0 %1970
    %v1973 = vsel %vm870, %v932, %v1919
    %v1974 = vsel %vm279, %v1973, %v1923
    %vm1975 = vcmask 392192
    %v1976 = vsel %vm1975, %v1974, %v1927
    %v1977 = vsel %vm153, %v1976, %v1931
    %vm1978 = vcmask 654336
    %v1979 = vsel %vm1978, %v1977, %v1935
    %v1980 = vsel %vm424, %v1979, %v1939
    %vm1981 = vcmask 916480
    %v1982 = vsel %vm1981, %v1980, %v1943
    %v1983 = vsel %vm870, %v1456, %v1947
    %v1984 = vsel %vm279, %v1983, %v1951
    %v1985 = vsel %vm1975, %v1984, %v1955
    %v1986 = vsel %vm153, %v1985, %v1959
    %v1987 = vsel %vm1978, %v1986, %v1963
    %v1988 = vsel %vm424, %v1987, %v1967
    %v1989 = vsel %vm1981, %v1988, %v1971
    %v1990 = vld [vmem:[%s9] sm:$0xff]
    %v1991 = vld [vmem:[%s9 + $0x8] sm:$0xff]
    %v1992 = vld [vmem:[%s9 + $0x10] sm:$0xff]
    %v1993 = vld [vmem:[%s9 + $0x18] sm:$0xff]
    %v1994 = vld [vmem:[%s9 + $0x20] sm:$0xff]
    %v1995 = vld [vmem:[%s9 + $0x28] sm:$0xff]
    %v1996 = vld [vmem:[%s9 + $0x30] sm:$0xff]
    %v1997 = vld [vmem:[%s9 + $0x38] sm:$0xff]
    %v1998 = vld [vmem:[%s9 + $0x40] sm:$0xff]
    %v1999 = vld [vmem:[%s9 + $0x48] sm:$0xff]
    %v2000 = vld [vmem:[%s9 + $0x50] sm:$0xff]
    %v2001 = vld [vmem:[%s9 + $0x58] sm:$0xff]
    %v2002 = vld [vmem:[%s9 + $0x60] sm:$0xff]
    %v2003 = vld [vmem:[%s9 + $0x68] sm:$0xff]
    %v2004 = vld [vmem:[%s9 + $0x70] sm:$0xff]
    %v2005 = vld [vmem:[%s9 + $0x78] sm:$0xff]
    %v2006 = vld [vmem:[%s9 + $0x80] sm:$0xff]
    %v2007 = vld [vmem:[%s9 + $0x88] sm:$0xff]
    %v2008 = vld [vmem:[%s9 + $0x90] sm:$0xff]
    %v2009 = vld [vmem:[%s9 + $0x98] sm:$0xff]
    %v2010 = vld [vmem:[%s9 + $0xa0] sm:$0xff]
    %v2011 = vld [vmem:[%s9 + $0xa8] sm:$0xff]
    %v2012 = vld [vmem:[%s9 + $0xb0] sm:$0xff]
    %v2013 = vld [vmem:[%s9 + $0xb8] sm:$0xff]
    %v2014 = vld [vmem:[%s9 + $0xc0] sm:$0xff]
    %v2015 = vld [vmem:[%s9 + $0xc8] sm:$0xff]
    %v2016 = vld [vmem:[%s9 + $0xd0] sm:$0xff]
    %v2017 = vld [vmem:[%s9 + $0xd8] sm:$0xff]
    %v2018 = vld [vmem:[%s9 + $0xe0] sm:$0xff]
    %v2019 = vld [vmem:[%s9 + $0xe8] sm:$0xff]
    %v2020 = vld [vmem:[%s9 + $0xf0] sm:$0xff]
    %v2021 = vld [vmem:[%s9 + $0xf8] sm:$0xff]
    %v2022 = vld [vmem:[%s9 + $0x100] sm:$0xff]
    %v2023 = vld [vmem:[%s9 + $0x108] sm:$0xff]
    %v2024 = vld [vmem:[%s9 + $0x110] sm:$0xff]
    %v2025 = vld [vmem:[%s9 + $0x118] sm:$0xff]
    %v2026 = vld [vmem:[%s9 + $0x120] sm:$0xff]
    %v2027 = vld [vmem:[%s9 + $0x128] sm:$0xff]
    %v2028 = vld [vmem:[%s9 + $0x130] sm:$0xff]
    %v2029 = vld [vmem:[%s9 + $0x138] sm:$0xff]
    %v2030 = vld [vmem:[%s9 + $0x140] sm:$0xff]
    %v2031 = vld [vmem:[%s9 + $0x148] sm:$0xff]
    %v2032 = vld [vmem:[%s9 + $0x150] sm:$0xff]
    %v2033 = vld [vmem:[%s9 + $0x158] sm:$0xff]
    %v2034 = vld [vmem:[%s9 + $0x160] sm:$0xff]
    %v2035 = vld [vmem:[%s9 + $0x168] sm:$0xff]
    %v2036 = vld [vmem:[%s9 + $0x170] sm:$0xff]
    %v2037 = vld [vmem:[%s9 + $0x178] sm:$0xff]
    %v2038 = vld [vmem:[%s9 + $0x180] sm:$0xff]
    %v2039 = vld [vmem:[%s9 + $0x188] sm:$0xff]
    %v2040 = vld [vmem:[%s9 + $0x190] sm:$0xff]
    %v2041 = vld [vmem:[%s9 + $0x198] sm:$0xff]
    %v2042 = vld [vmem:[%s9 + $0x1a0] sm:$0xff]
    %v2043 = vld [vmem:[%s9 + $0x1a8] sm:$0xff]
    %v2044 = vld [vmem:[%s9 + $0x1b0] sm:$0xff]
    %v2045 = vld [vmem:[%s9 + $0x1b8] sm:$0xff]
    %v2046 = vld [vmem:[%s9 + $0x1c0] sm:$0xff]
    %v2047 = vld [vmem:[%s9 + $0x1c8] sm:$0xff]
    %v2048 = vld [vmem:[%s9 + $0x1d0] sm:$0xff]
    %v2049 = vld [vmem:[%s9 + $0x1d8] sm:$0xff]
    %v2050 = vld [vmem:[%s9 + $0x1e0] sm:$0xff]
    %v2051 = vld [vmem:[%s9 + $0x1e8] sm:$0xff]
    %v2052 = vld [vmem:[%s9 + $0x1f0] sm:$0xff]
    %v2053 = vld [vmem:[%s9 + $0x1f8] sm:$0xff]
    %v2054 = vld [vmem:[%s10] sm:$0x3]
    %v2056 = vperm.slane %v2054, 0
    %v2057 = vperm.slane %v2054, 1
    %2060 = vmatpush.msra.mxu0 %v2020
    %2061 = vmatpush.msra.mxu0 %v2018
    %2062 = vmatpush.msra.mxu0 %v2016
    %2063 = vmatpush.msra.mxu0 %v2014
    %2064 = vmatpush.msra.mxu0 %v2012
    %2065 = vmatpush.msra.mxu0 %v2010
    %2066 = vmatpush.msra.mxu0 %v2008
    %2067 = vmatpush.msra.mxu0 %v2006
    %2068 = vmatpush.msra.mxu0 %v2004
    %2069 = vmatpush.msra.mxu0 %v2002
    %2070 = vmatpush.msra.mxu0 %v2000
    %2071 = vmatpush.msra.mxu0 %v1998
    %2072 = vmatpush.msra.mxu0 %v1996
    %2073 = vmatpush.msra.mxu0 %v1994
    %2074 = vmatpush.msra.mxu0 %v1992
    %2075 = vmatpush.msra.mxu0 %v1990
    %2076 = vmatmul.f32.gmra.mxu0 %v1982
    %v2077 = vpop.f32.mrf.mxu0
    %v2078 = vadd.f32 %v2056, %v2077
    %2079 = vdwg.mxu0
    %2080 = vmatpush.msra.mxu0 %v2052
    %2081 = vmatpush.msra.mxu0 %v2050
    %2082 = vmatpush.msra.mxu0 %v2048
    %2083 = vmatpush.msra.mxu0 %v2046
    %2084 = vmatpush.msra.mxu0 %v2044
    %2085 = vmatpush.msra.mxu0 %v2042
    %2086 = vmatpush.msra.mxu0 %v2040
    %2087 = vmatpush.msra.mxu0 %v2038
    %2088 = vmatpush.msra.mxu0 %v2036
    %2089 = vmatpush.msra.mxu0 %v2034
    %2090 = vmatpush.msra.mxu0 %v2032
    %2091 = vmatpush.msra.mxu0 %v2030
    %2092 = vmatpush.msra.mxu0 %v2028
    %2093 = vmatpush.msra.mxu0 %v2026
    %2094 = vmatpush.msra.mxu0 %v2024
    %2095 = vmatpush.msra.mxu0 %v2022
    %2096 = vmatmul.f32.gmra.mxu0 %v1989
    %v2097 = vpop.f32.mrf.mxu0
    %v2098 = vadd.f32 %v2078, %v2097
    %2099 = vdwg.mxu0
    %2100 = vmatpush.msra.mxu0 %v2021
    %2101 = vmatpush.msra.mxu0 %v2019
    %2102 = vmatpush.msra.mxu0 %v2017
    %2103 = vmatpush.msra.mxu0 %v2015
    %2104 = vmatpush.msra.mxu0 %v2013
    %2105 = vmatpush.msra.mxu0 %v2011
    %2106 = vmatpush.msra.mxu0 %v2009
    %2107 = vmatpush.msra.mxu0 %v2007
    %2108 = vmatpush.msra.mxu0 %v2005
    %2109 = vmatpush.msra.mxu0 %v2003
    %2110 = vmatpush.msra.mxu0 %v2001
    %2111 = vmatpush.msra.mxu0 %v1999
    %2112 = vmatpush.msra.mxu0 %v1997
    %2113 = vmatpush.msra.mxu0 %v1995
    %2114 = vmatpush.msra.mxu0 %v1993
    %2115 = vmatpush.msra.mxu0 %v1991
    %2116 = vmatmul.f32.gmra.mxu0 %v1982
    %v2117 = vpop.f32.mrf.mxu0
    %v2118 = vadd.f32 %v2057, %v2117
    %2119 = vdwg.mxu0
    %2120 = vmatpush.msra.mxu0 %v2053
    %2121 = vmatpush.msra.mxu0 %v2051
    %2122 = vmatpush.msra.mxu0 %v2049
    %2123 = vmatpush.msra.mxu0 %v2047
    %2124 = vmatpush.msra.mxu0 %v2045
    %2125 = vmatpush.msra.mxu0 %v2043
    %2126 = vmatpush.msra.mxu0 %v2041
    %2127 = vmatpush.msra.mxu0 %v2039
    %2128 = vmatpush.msra.mxu0 %v2037
    %2129 = vmatpush.msra.mxu0 %v2035
    %2130 = vmatpush.msra.mxu0 %v2033
    %2131 = vmatpush.msra.mxu0 %v2031
    %2132 = vmatpush.msra.mxu0 %v2029
    %2133 = vmatpush.msra.mxu0 %v2027
    %2134 = vmatpush.msra.mxu0 %v2025
    %2135 = vmatpush.msra.mxu0 %v2023
    %2136 = vmatmul.f32.gmra.mxu0 %v1989
    %v2137 = vpop.f32.mrf.mxu0
    %v2138 = vadd.f32 %v2118, %v2137
    %2139 = vdwg.mxu0
    %2140 = vst [vmem:[%s11] sm:$0xff] %v2098
    %2141 = vst [vmem:[%s11 + $0x8] sm:$0xff] %v2138
    // Predicated region
    $region50: #{attention_gcn_forward.1} parent=1 // pred_check
      _
    $region51: #{attention_gcn_forward.1} parent=1 // pred_check_branch
      %2143 = sbr.rel (0) target = $region53
    $region52: #{attention_gcn_forward.1} parent=1 // pred_region
      _
    $region53: #{attention_gcn_forward.1} parent=1 // pred_fallthru
      _
    // Predicated region
    $region54: #{attention_gcn_forward.1} parent=1 // pred_check
      _
    $region55: #{attention_gcn_forward.1} parent=1 // pred_check_branch
      %2145 = sbr.rel (0) target = $region57
    $region56: #{attention_gcn_forward.1} parent=1 // pred_region
      _
    $region57: #{attention_gcn_forward.1} parent=1 // pred_fallthru
      _
    %2146 = vsyncpa [#allocation4], 1

</llo_original>
